<compile_context>
chip_gen: v5e
topology: v5e:2x2
jax: 0.10.0
libtpu: 0.0.40
codegen_flags: <defaults>
</compile_context>

<pallas_src>
import functools

import jax
import jax.numpy as jnp
from jax.experimental import pallas as pl
from jax.experimental.pallas import tpu as pltpu

LRELU_SLOPE = 0.1
_VMEM_LIMIT_BYTES = 48 * 1024 * 1024   # explicit scoped-VMEM raise (> default)


def _conv_out_len(length, k, stride, pad):
    return (length + 2 * pad - k) // stride + 1


# ----------------------------------------------------------------------------- fused sub-discriminator kernel
def _disc_s_kernel(x_ref, w1_ref, b1_ref, w2_ref, b2_ref, w3_ref, b3_ref,
                   wp_ref, bp_ref,
                   f1_ref, f2_ref, f3_ref, fp_ref, xp_ref,
                   s0, s1, s2, s3, *, L, L1, L2, L3, Lp, Lpool):
    """Full DiscriminatorS stack + fused AvgPool1d for one batch item.

    x_ref : (L, 1) waveform block
    w1_ref: (5, 1, 32)   b1_ref: (1, 32)    (layer 1, Cin=1 -> VPU taps)
    w2_ref: (160, 32)    b2_ref: (1, 32)    (tap-merged (K*Cin, Cout))
    w3_ref: (160, 64)    b3_ref: (1, 64)
    wp_ref: (3, 1, 64)   bp_ref: (1, 1)     (conv_post, VPU + lane-reduce path)
    f*_ref: feature-map outputs; fp_ref doubles as the y_d source (fp32).
    xp_ref: AvgPool1d(4,2,2) of the waveform -> input of the next scale.
    s0..s3: VMEM scratch holding the zero-padded previous activation (fp32).
    """
    f32 = jnp.float32

    def lrelu(v):
        return jnp.where(v >= 0, v, LRELU_SLOPE * v)

    # Zero the pad rows every step.  (Hoisting this under pl.when(pid==0) is
    # unsafe together with a "parallel" grid axis on multi-TC chips: a core that
    # never runs step 0 would read uninitialised scratch.)
    s0[pl.ds(0, 2), :] = jnp.zeros((2, 32), f32)
    s0[pl.ds(2 + L, 2), :] = jnp.zeros((2, 32), f32)
    s1[pl.ds(0, 2), :] = jnp.zeros((2, 32), f32)
    s1[pl.ds(2 + L1, 2), :] = jnp.zeros((2, 32), f32)
    s2[pl.ds(0, 2), :] = jnp.zeros((2, 32), f32)
    s2[pl.ds(2 + L2, 2), :] = jnp.zeros((2, 32), f32)
    s3[pl.ds(0, 1), :] = jnp.zeros((1, 64), f32)
    s3[pl.ds(1 + L3, 1), :] = jnp.zeros((1, 64), f32)

    # Padded waveform, pre-broadcast to 32 lanes ONCE (no per-tap broadcast).
    s0[pl.ds(2, L), :] = jnp.broadcast_to(x_ref[...].astype(f32), (L, 32))

    # ---- fused AvgPool1d(4, 2, padding=2) for the next scale ------------------
    # s0 already carries exactly the +/-2 zero padding AvgPool needs.
    accp = (s0[pl.ds(0, Lpool, stride=2), :] + s0[pl.ds(1, Lpool, stride=2), :]
            + s0[pl.ds(2, Lpool, stride=2), :] + s0[pl.ds(3, Lpool, stride=2), :])
    xp_ref[...] = (accp[:, :1] * 0.25).astype(xp_ref.dtype)

    # ---- layer 1: Conv1d(1->32, k=5, s=1, p=2) + leaky_relu (VPU, Cin=1) ------
    acc1 = jnp.zeros((L1, 32), f32)
    for k in range(5):
        acc1 = acc1 + s0[pl.ds(k, L1), :] * w1_ref[k]      # (L1,32)*(1,32)
    h1 = lrelu(acc1 + b1_ref[...])
    f1_ref[...] = h1.astype(f1_ref.dtype)
    s1[pl.ds(2, L1), :] = h1

    # ---- layer 2: Conv1d(32->32, k=5, s=2, p=2) + leaky_relu (tap-merged MXU) -
    x2 = jnp.concatenate(
        [s1[pl.ds(k, L2, stride=2), :] for k in range(5)], axis=-1)   # (L2, 160)
    h2 = lrelu(jnp.dot(x2, w2_ref[...], preferred_element_type=f32) + b2_ref[...])
    f2_ref[...] = h2.astype(f2_ref.dtype)
    s2[pl.ds(2, L2), :] = h2

    # ---- layer 3: Conv1d(32->64, k=5, s=2, p=2) + leaky_relu ------------------
    x3 = jnp.concatenate(
        [s2[pl.ds(k, L3, stride=2), :] for k in range(5)], axis=-1)   # (L3, 160)
    h3 = lrelu(jnp.dot(x3, w3_ref[...], preferred_element_type=f32) + b3_ref[...])
    f3_ref[...] = h3.astype(f3_ref.dtype)
    s3[pl.ds(1, L3), :] = h3

    # ---- conv_post: Conv1d(64->1, k=3, s=1, p=1) on the VPU + lane reduce -----
    # (a 1-wide MXU matmul fills 1/256 output lanes; this path uses otherwise
    #  idle VPU/XLU slots and avoids the (Lp, 192) lane concat entirely)
    pacc = (s3[pl.ds(0, Lp), :] * wp_ref[0]
            + s3[pl.ds(1, Lp), :] * wp_ref[1]
            + s3[pl.ds(2, Lp), :] * wp_ref[2])              # (Lp, 64)
    hp = jnp.sum(pacc, axis=-1, keepdims=True) + bp_ref[...]
    fp_ref[...] = hp.astype(fp_ref.dtype)


def fused_discriminator_s(x, p, fmap_dtype=jnp.bfloat16):
    """x: (N, L, 1). One pallas_call = 4 convs + the AvgPool for the next scale.

    Returns (y_d: (N, Lp) fp32,
             fmap: [(N,L1,32), (N,L2,32), (N,L3,64)] in fmap_dtype + (N,Lp,1) fp32,
             x_pooled: (N, Lpool, 1) fp32).
    """
    N, L, _ = x.shape
    L1 = _conv_out_len(L, 5, 1, 2)           # == L
    L2 = _conv_out_len(L1, 5, 2, 2)
    L3 = _conv_out_len(L2, 5, 2, 2)
    Lp = _conv_out_len(L3, 3, 1, 1)          # == L3
    Lpool = _conv_out_len(L, 4, 2, 2)        # AvgPool1d(4, 2, padding=2)

    c1, c2, c3 = p["convs"]
    post = p["post"]
    w2m = c2["w"].reshape(5 * 32, 32)        # tap-merged (K*Cin, Cout), k-major
    w3m = c3["w"].reshape(5 * 32, 64)
    wpt = jnp.transpose(post["w"], (0, 2, 1))   # (3, 64, 1) -> (3, 1, 64)

    kernel = functools.partial(_disc_s_kernel, L=L, L1=L1, L2=L2, L3=L3,
                               Lp=Lp, Lpool=Lpool)
    f1, f2, f3, fp, xpool = pl.pallas_call(
        kernel,
        out_shape=(
            jax.ShapeDtypeStruct((N, L1, 32), fmap_dtype),
            jax.ShapeDtypeStruct((N, L2, 32), fmap_dtype),
            jax.ShapeDtypeStruct((N, L3, 64), fmap_dtype),
            jax.ShapeDtypeStruct((N, Lp, 1), jnp.float32),    # post output / y_d
            jax.ShapeDtypeStruct((N, Lpool, 1), jnp.float32), # pooled waveform
        ),
        grid=(N,),
        in_specs=[
            pl.BlockSpec((None, L, 1), lambda i: (i, 0, 0)),
            pl.BlockSpec((5, 1, 32), lambda i: (0, 0, 0)),
            pl.BlockSpec((1, 32), lambda i: (0, 0)),
            pl.BlockSpec((160, 32), lambda i: (0, 0)),
            pl.BlockSpec((1, 32), lambda i: (0, 0)),
            pl.BlockSpec((160, 64), lambda i: (0, 0)),
            pl.BlockSpec((1, 64), lambda i: (0, 0)),
            pl.BlockSpec((3, 1, 64), lambda i: (0, 0, 0)),
            pl.BlockSpec((1, 1), lambda i: (0, 0)),
        ],
        out_specs=(
            pl.BlockSpec((None, L1, 32), lambda i: (i, 0, 0)),
            pl.BlockSpec((None, L2, 32), lambda i: (i, 0, 0)),
            pl.BlockSpec((None, L3, 64), lambda i: (i, 0, 0)),
            pl.BlockSpec((None, Lp, 1), lambda i: (i, 0, 0)),
            pl.BlockSpec((None, Lpool, 1), lambda i: (i, 0, 0)),
        ),
        scratch_shapes=[
            pltpu.VMEM((L + 4, 32), jnp.float32),    # padded waveform (32-lane bcast)
            pltpu.VMEM((L1 + 4, 32), jnp.float32),   # padded layer-1 activation
            pltpu.VMEM((L2 + 4, 32), jnp.float32),   # padded layer-2 activation
            pltpu.VMEM((L3 + 2, 64), jnp.float32),   # padded layer-3 activation
        ],
        compiler_params=pltpu.CompilerParams(
            dimension_semantics=("parallel",),       # megacore split over fused batch
            vmem_limit_bytes=_VMEM_LIMIT_BYTES),
    )(x, c1["w"], c1["b"].reshape(1, 32), w2m, c2["b"].reshape(1, 32),
      w3m, c3["b"].reshape(1, 64), wpt, post["b"].reshape(1, 1))

    y_d = fp.reshape(N, Lp)                  # torch.flatten(post, 1, -1)
    return y_d, [f1, f2, f3, fp], xpool


# ----------------------------------------------------------------------------- model params
_CONV_CFG = [  # (Cin, Cout, K, stride, pad, leaky_relu)
    (1, 32, 5, 1, 2, True),
    (32, 32, 5, 2, 2, True),
    (32, 64, 5, 2, 2, True),
]
_POST_CFG = (64, 1, 3, 1, 1, False)


def _init_conv(key, cin, cout, k):
    kw, kb = jax.random.split(key)
    fan_in = cin * k
    w = jax.random.normal(kw, (k, cin, cout), jnp.float32) * (1.0 / jnp.sqrt(fan_in))
    b = jax.random.normal(kb, (cout,), jnp.float32) * 0.01
    return w, b


def init_pitch_discriminator_params(key, num_scales=3):
    params = []
    for _ in range(num_scales):
        key, sub = jax.random.split(key)
        convs = []
        for cin, cout, k, stride, pad, act in _CONV_CFG:
            sub, lk = jax.random.split(sub)
            w, b = _init_conv(lk, cin, cout, k)
            convs.append(dict(w=w, b=b, stride=stride, pad=pad, act=act))
        cin, cout, k, stride, pad, act = _POST_CFG
        sub, lk = jax.random.split(sub)
        w, b = _init_conv(lk, cin, cout, k)
        post = dict(w=w, b=b, stride=stride, pad=pad, act=act)
        params.append(dict(convs=convs, post=post))
    return params


# ----------------------------------------------------------------------------- forward
def pitch_discriminator_forward(y, y_hat, params, fmap_dtype=jnp.bfloat16):
    """y, y_hat: (B, T, 1) (NLC).  Matches PitchDiscriminator.forward."""
    B = y.shape[0]
    # Weights are shared between the real/generated streams within each scale,
    # so fuse them into one batch: (2B, T, 1).
    x = jnp.concatenate([y, y_hat], axis=0)
    y_d_rs, y_d_gs, fmap_rs, fmap_gs = [], [], [], []
    for p in params:
        y_d, fmap, x_pooled = fused_discriminator_s(x, p, fmap_dtype)
        y_d_rs.append(y_d[:B])
        y_d_gs.append(y_d[B:])
        fmap_rs.append([f[:B] for f in fmap])
        fmap_gs.append([f[B:] for f in fmap])
        x = x_pooled   # AvgPool1d(4,2,2), fused into the kernel's epilogue
    return y_d_rs, y_d_gs, fmap_rs, fmap_gs


# ----------------------------------------------------------------------------- pure-JAX reference (correctness check)
def _reference_forward(y, y_hat, params):
    def conv(x, w, b, stride, pad):
        out = jax.lax.conv_general_dilated(
            x, w, window_strides=(stride,), padding=[(pad, pad)],
            dimension_numbers=("NWC", "WIO", "NWC"),
            precision=jax.lax.Precision.HIGHEST)
        return out + b.reshape(1, 1, -1)

    def pool(x):
        s = jax.lax.reduce_window(x, 0.0, jax.lax.add, (1, 4, 1), (1, 2, 1),
                                  [(0, 0), (2, 2), (0, 0)])
        return s * 0.25  # count_include_pad=True

    def disc(x, p):
        fmap = []
        for layer in p["convs"]:
            x = conv(x, layer["w"], layer["b"], layer["stride"], layer["pad"])
            x = jnp.where(x >= 0, x, LRELU_SLOPE * x)
            fmap.append(x)
        post = p["post"]
        x = conv(x, post["w"], post["b"], post["stride"], post["pad"])
        fmap.append(x)
        return x.reshape(x.shape[0], -1), fmap

    y_d_rs, y_d_gs, fmap_rs, fmap_gs = [], [], [], []
    for i, p in enumerate(params):
        if i != 0:
            y = pool(y)
            y_hat = pool(y_hat)
        dr, fr = disc(y, p)
        dg, fg = disc(y_hat, p)
        y_d_rs.append(dr)
        fmap_rs.append(fr)
        y_d_gs.append(dg)
        fmap_gs.append(fg)
    return y_d_rs, y_d_gs, fmap_rs, fmap_gs


# ----------------------------------------------------------------------------- main
if __name__ == "__main__":
    key = jax.random.PRNGKey(0)
    k_p, k_y, k_g = jax.random.split(key, 3)

    B, T = 2, 64
    # NLC layout; the equivalent PyTorch input would be (B, 1, T)
    y = jax.random.normal(k_y, (B, T, 1), jnp.float32)
    y_hat = jax.random.normal(k_g, (B, T, 1), jnp.float32)

    params = init_pitch_discriminator_params(k_p, num_scales=3)

    out = pitch_discriminator_forward(y, y_hat, params)   # bf16 fmaps, fp32 y_d
    out = jax.block_until_ready(out)

    y_d_rs, y_d_gs, fmap_rs, fmap_gs = out
    assert len(y_d_rs) == 3 and len(y_d_gs) == 3
    assert all(len(f) == 4 for f in fmap_rs) and all(len(f) == 4 for f in fmap_gs)
    assert y_d_rs[0].shape == (B, 16)
    assert y_d_rs[1].shape == (B, 9)
    assert y_d_rs[2].shape == (B, 5)

    # Tighter, dtype-aware check vs a plain XLA reference: 5e-2 on the fp32 path
    # (y_d / conv_post; catches any tap/stride misalignment, which shows up as
    # O(0.3+) errors, while tolerating MXU default-precision noise) and 1e-1 on
    # the bf16-stored feature maps.
    ref = _reference_forward(y, y_hat, params)
    leaves = jax.tree_util.tree_leaves(out)
    ref_leaves = jax.tree_util.tree_leaves(ref)
    assert len(leaves) == len(ref_leaves)
    for a, b in zip(leaves, ref_leaves):
        assert a.shape == b.shape, f"shape mismatch {a.shape} vs {b.shape}"
        tol = 1e-1 if a.dtype == jnp.bfloat16 else 5e-2
        err = float(jnp.max(jnp.abs(a.astype(jnp.float32) - b)))
        assert err < tol, f"mismatch vs reference: max abs err {err} (tol {tol}, dtype {a.dtype})"

    print("KERNEL_OK")
</pallas_src>

<mosaic_0001>
module attributes {stable_mosaic.version = 11 : i64} {
  func.func @_disc_s_kernel(%arg0: i32, %arg1: memref<1x64x1xf32, #tpu.memory_space<vmem>>, %arg2: memref<5x1x32xf32, #tpu.memory_space<vmem>>, %arg3: memref<1x32xf32, #tpu.memory_space<vmem>>, %arg4: memref<160x32xf32, #tpu.memory_space<vmem>>, %arg5: memref<1x32xf32, #tpu.memory_space<vmem>>, %arg6: memref<160x64xf32, #tpu.memory_space<vmem>>, %arg7: memref<1x64xf32, #tpu.memory_space<vmem>>, %arg8: memref<3x1x64xf32, #tpu.memory_space<vmem>>, %arg9: memref<1x1xf32, #tpu.memory_space<vmem>>, %arg10: memref<1x64x32xbf16, #tpu.memory_space<vmem>>, %arg11: memref<1x32x32xbf16, #tpu.memory_space<vmem>>, %arg12: memref<1x16x64xbf16, #tpu.memory_space<vmem>>, %arg13: memref<1x16x1xf32, #tpu.memory_space<vmem>>, %arg14: memref<1x33x1xf32, #tpu.memory_space<vmem>>, %arg15: memref<68x32xf32, #tpu.memory_space<vmem>>, %arg16: memref<68x32xf32, #tpu.memory_space<vmem>>, %arg17: memref<36x32xf32, #tpu.memory_space<vmem>>, %arg18: memref<18x64xf32, #tpu.memory_space<vmem>>) attributes {dimension_semantics = [#tpu.dimension_semantics<parallel>], iteration_bounds = array<i64: 4>, scalar_prefetch = 0 : i64, scratch_operands = 4 : i64, tpu.core_type = #tpu.core_type<tc>, window_params = [{transform_indices = @transform_0, window_bounds = array<i64: 1, 64, 1>}, {pipeline_mode = #tpu.pipeline_mode<synchronous>, transform_indices = @transform_1, window_bounds = array<i64: 5, 1, 32>}, {pipeline_mode = #tpu.pipeline_mode<synchronous>, transform_indices = @transform_2, window_bounds = array<i64: 1, 32>}, {pipeline_mode = #tpu.pipeline_mode<synchronous>, transform_indices = @transform_3, window_bounds = array<i64: 160, 32>}, {pipeline_mode = #tpu.pipeline_mode<synchronous>, transform_indices = @transform_4, window_bounds = array<i64: 1, 32>}, {pipeline_mode = #tpu.pipeline_mode<synchronous>, transform_indices = @transform_5, window_bounds = array<i64: 160, 64>}, {pipeline_mode = #tpu.pipeline_mode<synchronous>, transform_indices = @transform_6, window_bounds = array<i64: 1, 64>}, {pipeline_mode = #tpu.pipeline_mode<synchronous>, transform_indices = @transform_7, window_bounds = array<i64: 3, 1, 64>}, {pipeline_mode = #tpu.pipeline_mode<synchronous>, transform_indices = @transform_8, window_bounds = array<i64: 1, 1>}, {transform_indices = @transform_9, window_bounds = array<i64: 1, 64, 32>}, {transform_indices = @transform_10, window_bounds = array<i64: 1, 32, 32>}, {transform_indices = @transform_11, window_bounds = array<i64: 1, 16, 64>}, {transform_indices = @transform_12, window_bounds = array<i64: 1, 16, 1>}, {transform_indices = @transform_13, window_bounds = array<i64: 1, 33, 1>}]} {
    %cst = arith.constant 0.000000e+00 : f32
    %0 = vector.broadcast %cst : f32 to vector<2x32xf32>
    %c0 = arith.constant 0 : index
    %c0_0 = arith.constant 0 : index
    %1 = vector.load %arg15[%c0, %c0_0] : memref<68x32xf32, #tpu.memory_space<vmem>>, vector<2x32xf32>
    tpu.vector_store %arg15[%c0, %c0_0], %0 {strides = array<i32>} : memref<68x32xf32, #tpu.memory_space<vmem>>, vector<2x32xf32>,
    %cst_1 = arith.constant 0.000000e+00 : f32
    %2 = vector.broadcast %cst_1 : f32 to vector<2x32xf32>
    %c66 = arith.constant 66 : index
    %c0_2 = arith.constant 0 : index
    %3 = vector.load %arg15[%c66, %c0_2] : memref<68x32xf32, #tpu.memory_space<vmem>>, vector<2x32xf32>
    tpu.vector_store %arg15[%c66, %c0_2], %2 {strides = array<i32>} : memref<68x32xf32, #tpu.memory_space<vmem>>, vector<2x32xf32>,
    %cst_3 = arith.constant 0.000000e+00 : f32
    %4 = vector.broadcast %cst_3 : f32 to vector<2x32xf32>
    %c0_4 = arith.constant 0 : index
    %c0_5 = arith.constant 0 : index
    %5 = vector.load %arg16[%c0_4, %c0_5] : memref<68x32xf32, #tpu.memory_space<vmem>>, vector<2x32xf32>
    tpu.vector_store %arg16[%c0_4, %c0_5], %4 {strides = array<i32>} : memref<68x32xf32, #tpu.memory_space<vmem>>, vector<2x32xf32>,
    %cst_6 = arith.constant 0.000000e+00 : f32
    %6 = vector.broadcast %cst_6 : f32 to vector<2x32xf32>
    %c66_7 = arith.constant 66 : index
    %c0_8 = arith.constant 0 : index
    %7 = vector.load %arg16[%c66_7, %c0_8] : memref<68x32xf32, #tpu.memory_space<vmem>>, vector<2x32xf32>
    tpu.vector_store %arg16[%c66_7, %c0_8], %6 {strides = array<i32>} : memref<68x32xf32, #tpu.memory_space<vmem>>, vector<2x32xf32>,
    %cst_9 = arith.constant 0.000000e+00 : f32
    %8 = vector.broadcast %cst_9 : f32 to vector<2x32xf32>
    %c0_10 = arith.constant 0 : index
    %c0_11 = arith.constant 0 : index
    %9 = vector.load %arg17[%c0_10, %c0_11] : memref<36x32xf32, #tpu.memory_space<vmem>>, vector<2x32xf32>
    tpu.vector_store %arg17[%c0_10, %c0_11], %8 {strides = array<i32>} : memref<36x32xf32, #tpu.memory_space<vmem>>, vector<2x32xf32>,
    %cst_12 = arith.constant 0.000000e+00 : f32
    %10 = vector.broadcast %cst_12 : f32 to vector<2x32xf32>
    %c34 = arith.constant 34 : index
    %c0_13 = arith.constant 0 : index
    %11 = vector.load %arg17[%c34, %c0_13] : memref<36x32xf32, #tpu.memory_space<vmem>>, vector<2x32xf32>
    tpu.vector_store %arg17[%c34, %c0_13], %10 {strides = array<i32>} : memref<36x32xf32, #tpu.memory_space<vmem>>, vector<2x32xf32>,
    %cst_14 = arith.constant 0.000000e+00 : f32
    %12 = vector.broadcast %cst_14 : f32 to vector<1x64xf32>
    %c0_15 = arith.constant 0 : index
    %c0_16 = arith.constant 0 : index
    %13 = vector.load %arg18[%c0_15, %c0_16] : memref<18x64xf32, #tpu.memory_space<vmem>>, vector<1x64xf32>
    tpu.vector_store %arg18[%c0_15, %c0_16], %12 {strides = array<i32>} : memref<18x64xf32, #tpu.memory_space<vmem>>, vector<1x64xf32>,
    %cst_17 = arith.constant 0.000000e+00 : f32
    %14 = vector.broadcast %cst_17 : f32 to vector<1x64xf32>
    %c17 = arith.constant 17 : index
    %c0_18 = arith.constant 0 : index
    %15 = vector.load %arg18[%c17, %c0_18] : memref<18x64xf32, #tpu.memory_space<vmem>>, vector<1x64xf32>
    tpu.vector_store %arg18[%c17, %c0_18], %14 {strides = array<i32>} : memref<18x64xf32, #tpu.memory_space<vmem>>, vector<1x64xf32>,
    %c0_19 = arith.constant 0 : index
    %c0_20 = arith.constant 0 : index
    %c0_21 = arith.constant 0 : index
    %16 = vector.load %arg1[%c0_19, %c0_20, %c0_21] : memref<1x64x1xf32, #tpu.memory_space<vmem>>, vector<1x64x1xf32>
    %17 = vector.shape_cast %16 : vector<1x64x1xf32> to vector<64x1xf32>
    %18 = vector.shape_cast %17 : vector<64x1xf32> to vector<64x1xf32>
    %19 = vector.broadcast %18 : vector<64x1xf32> to vector<64x32xf32>
    %c2 = arith.constant 2 : index
    %c0_22 = arith.constant 0 : index
    %20 = vector.load %arg15[%c2, %c0_22] : memref<68x32xf32, #tpu.memory_space<vmem>>, vector<64x32xf32>
    tpu.vector_store %arg15[%c2, %c0_22], %19 {strides = array<i32>} : memref<68x32xf32, #tpu.memory_space<vmem>>, vector<64x32xf32>,
    %c0_23 = arith.constant 0 : index
    %c0_24 = arith.constant 0 : index
    %21 = tpu.strided_load %arg15[%c0_23, %c0_24] {strides = array<i32: 2, 1>} : memref<68x32xf32, #tpu.memory_space<vmem>>, vector<33x32xf32>
    %c1 = arith.constant 1 : index
    %c0_25 = arith.constant 0 : index
    %22 = tpu.strided_load %arg15[%c1, %c0_25] {strides = array<i32: 2, 1>} : memref<68x32xf32, #tpu.memory_space<vmem>>, vector<33x32xf32>
    %23 = arith.addf %21, %22 : vector<33x32xf32>
    %c2_26 = arith.constant 2 : index
    %c0_27 = arith.constant 0 : index
    %24 = tpu.strided_load %arg15[%c2_26, %c0_27] {strides = array<i32: 2, 1>} : memref<68x32xf32, #tpu.memory_space<vmem>>, vector<33x32xf32>
    %25 = arith.addf %23, %24 : vector<33x32xf32>
    %c3 = arith.constant 3 : index
    %c0_28 = arith.constant 0 : index
    %26 = tpu.strided_load %arg15[%c3, %c0_28] {strides = array<i32: 2, 1>} : memref<68x32xf32, #tpu.memory_space<vmem>>, vector<33x32xf32>
    %27 = arith.addf %25, %26 : vector<33x32xf32>
    %28 = vector.extract_strided_slice %27 {offsets = [0, 0], sizes = [33, 1], strides = [1, 1]} : vector<33x32xf32> to vector<33x1xf32>
    %cst_29 = arith.constant 2.500000e-01 : f32
    %29 = vector.broadcast %cst_29 : f32 to vector<33x1xf32>
    %30 = arith.mulf %28, %29 : vector<33x1xf32>
    %c0_30 = arith.constant 0 : index
    %c0_31 = arith.constant 0 : index
    %c0_32 = arith.constant 0 : index
    %31 = vector.load %arg14[%c0_30, %c0_31, %c0_32] : memref<1x33x1xf32, #tpu.memory_space<vmem>>, vector<1x33x1xf32>
    %32 = vector.shape_cast %31 : vector<1x33x1xf32> to vector<33x1xf32>
    %33 = vector.shape_cast %30 : vector<33x1xf32> to vector<1x33x1xf32>
    tpu.vector_store %arg14[%c0_30, %c0_31, %c0_32], %33 {strides = array<i32>} : memref<1x33x1xf32, #tpu.memory_space<vmem>>, vector<1x33x1xf32>,
    %cst_33 = arith.constant 0.000000e+00 : f32
    %34 = vector.broadcast %cst_33 : f32 to vector<64x32xf32>
    %c0_34 = arith.constant 0 : index
    %c0_35 = arith.constant 0 : index
    %35 = vector.load %arg15[%c0_34, %c0_35] : memref<68x32xf32, #tpu.memory_space<vmem>>, vector<64x32xf32>
    %c0_36 = arith.constant 0 : index
    %c0_37 = arith.constant 0 : index
    %c0_38 = arith.constant 0 : index
    %36 = vector.load %arg2[%c0_36, %c0_37, %c0_38] : memref<5x1x32xf32, #tpu.memory_space<vmem>>, vector<1x1x32xf32>
    %37 = vector.shape_cast %36 : vector<1x1x32xf32> to vector<1x32xf32>
    %38 = vector.broadcast %37 : vector<1x32xf32> to vector<64x32xf32>
    %39 = arith.mulf %35, %38 : vector<64x32xf32>
    %40 = arith.addf %34, %39 : vector<64x32xf32>
    %c1_39 = arith.constant 1 : index
    %c0_40 = arith.constant 0 : index
    %41 = vector.load %arg15[%c1_39, %c0_40] : memref<68x32xf32, #tpu.memory_space<vmem>>, vector<64x32xf32>
    %c1_41 = arith.constant 1 : index
    %c0_42 = arith.constant 0 : index
    %c0_43 = arith.constant 0 : index
    %42 = vector.load %arg2[%c1_41, %c0_42, %c0_43] : memref<5x1x32xf32, #tpu.memory_space<vmem>>, vector<1x1x32xf32>
    %43 = vector.shape_cast %42 : vector<1x1x32xf32> to vector<1x32xf32>
    %44 = vector.broadcast %43 : vector<1x32xf32> to vector<64x32xf32>
    %45 = arith.mulf %41, %44 : vector<64x32xf32>
    %46 = arith.addf %40, %45 : vector<64x32xf32>
    %c2_44 = arith.constant 2 : index
    %c0_45 = arith.constant 0 : index
    %47 = vector.load %arg15[%c2_44, %c0_45] : memref<68x32xf32, #tpu.memory_space<vmem>>, vector<64x32xf32>
    %c2_46 = arith.constant 2 : index
    %c0_47 = arith.constant 0 : index
    %c0_48 = arith.constant 0 : index
    %48 = vector.load %arg2[%c2_46, %c0_47, %c0_48] : memref<5x1x32xf32, #tpu.memory_space<vmem>>, vector<1x1x32xf32>
    %49 = vector.shape_cast %48 : vector<1x1x32xf32> to vector<1x32xf32>
    %50 = vector.broadcast %49 : vector<1x32xf32> to vector<64x32xf32>
    %51 = arith.mulf %47, %50 : vector<64x32xf32>
    %52 = arith.addf %46, %51 : vector<64x32xf32>
    %c3_49 = arith.constant 3 : index
    %c0_50 = arith.constant 0 : index
    %53 = vector.load %arg15[%c3_49, %c0_50] : memref<68x32xf32, #tpu.memory_space<vmem>>, vector<64x32xf32>
    %c3_51 = arith.constant 3 : index
    %c0_52 = arith.constant 0 : index
    %c0_53 = arith.constant 0 : index
    %54 = vector.load %arg2[%c3_51, %c0_52, %c0_53] : memref<5x1x32xf32, #tpu.memory_space<vmem>>, vector<1x1x32xf32>
    %55 = vector.shape_cast %54 : vector<1x1x32xf32> to vector<1x32xf32>
    %56 = vector.broadcast %55 : vector<1x32xf32> to vector<64x32xf32>
    %57 = arith.mulf %53, %56 : vector<64x32xf32>
    %58 = arith.addf %52, %57 : vector<64x32xf32>
    %c4 = arith.constant 4 : index
    %c0_54 = arith.constant 0 : index
    %59 = vector.load %arg15[%c4, %c0_54] : memref<68x32xf32, #tpu.memory_space<vmem>>, vector<64x32xf32>
    %c4_55 = arith.constant 4 : index
    %c0_56 = arith.constant 0 : index
    %c0_57 = arith.constant 0 : index
    %60 = vector.load %arg2[%c4_55, %c0_56, %c0_57] : memref<5x1x32xf32, #tpu.memory_space<vmem>>, vector<1x1x32xf32>
    %61 = vector.shape_cast %60 : vector<1x1x32xf32> to vector<1x32xf32>
    %62 = vector.broadcast %61 : vector<1x32xf32> to vector<64x32xf32>
    %63 = arith.mulf %59, %62 : vector<64x32xf32>
    %64 = arith.addf %58, %63 : vector<64x32xf32>
    %c0_58 = arith.constant 0 : index
    %c0_59 = arith.constant 0 : index
    %65 = vector.load %arg3[%c0_58, %c0_59] : memref<1x32xf32, #tpu.memory_space<vmem>>, vector<1x32xf32>
    %66 = vector.broadcast %65 : vector<1x32xf32> to vector<64x32xf32>
    %67 = arith.addf %64, %66 : vector<64x32xf32>
    %cst_60 = arith.constant 0.000000e+00 : f32
    %68 = vector.broadcast %cst_60 : f32 to vector<64x32xf32>
    %69 = arith.cmpf oge, %67, %68 : vector<64x32xf32>
    %cst_61 = arith.constant 1.000000e-01 : f32
    %70 = vector.broadcast %cst_61 : f32 to vector<64x32xf32>
    %71 = arith.mulf %70, %67 : vector<64x32xf32>
    %72 = arith.select %69, %67, %71 : vector<64x32xi1>, vector<64x32xf32>
    %73 = arith.truncf %72 : vector<64x32xf32> to vector<64x32xbf16>
    %c0_62 = arith.constant 0 : index
    %c0_63 = arith.constant 0 : index
    %c0_64 = arith.constant 0 : index
    %74 = vector.load %arg10[%c0_62, %c0_63, %c0_64] : memref<1x64x32xbf16, #tpu.memory_space<vmem>>, vector<1x64x32xbf16>
    %75 = vector.shape_cast %74 : vector<1x64x32xbf16> to vector<64x32xbf16>
    %76 = vector.shape_cast %73 : vector<64x32xbf16> to vector<1x64x32xbf16>
    tpu.vector_store %arg10[%c0_62, %c0_63, %c0_64], %76 {strides = array<i32>} : memref<1x64x32xbf16, #tpu.memory_space<vmem>>, vector<1x64x32xbf16>,
    %c2_65 = arith.constant 2 : index
    %c0_66 = arith.constant 0 : index
    %77 = vector.load %arg16[%c2_65, %c0_66] : memref<68x32xf32, #tpu.memory_space<vmem>>, vector<64x32xf32>
    tpu.vector_store %arg16[%c2_65, %c0_66], %72 {strides = array<i32>} : memref<68x32xf32, #tpu.memory_space<vmem>>, vector<64x32xf32>,
    %c0_67 = arith.constant 0 : index
    %c0_68 = arith.constant 0 : index
    %78 = tpu.strided_load %arg16[%c0_67, %c0_68] {strides = array<i32: 2, 1>} : memref<68x32xf32, #tpu.memory_space<vmem>>, vector<32x32xf32>
    %c1_69 = arith.constant 1 : index
    %c0_70 = arith.constant 0 : index
    %79 = tpu.strided_load %arg16[%c1_69, %c0_70] {strides = array<i32: 2, 1>} : memref<68x32xf32, #tpu.memory_space<vmem>>, vector<32x32xf32>
    %c2_71 = arith.constant 2 : index
    %c0_72 = arith.constant 0 : index
    %80 = tpu.strided_load %arg16[%c2_71, %c0_72] {strides = array<i32: 2, 1>} : memref<68x32xf32, #tpu.memory_space<vmem>>, vector<32x32xf32>
    %c3_73 = arith.constant 3 : index
    %c0_74 = arith.constant 0 : index
    %81 = tpu.strided_load %arg16[%c3_73, %c0_74] {strides = array<i32: 2, 1>} : memref<68x32xf32, #tpu.memory_space<vmem>>, vector<32x32xf32>
    %c4_75 = arith.constant 4 : index
    %c0_76 = arith.constant 0 : index
    %82 = tpu.strided_load %arg16[%c4_75, %c0_76] {strides = array<i32: 2, 1>} : memref<68x32xf32, #tpu.memory_space<vmem>>, vector<32x32xf32>
    %83 = tpu.concatenate %78, %79, %80, %81, %82 in 1 : vector<32x32xf32>, vector<32x32xf32>, vector<32x32xf32>, vector<32x32xf32>, vector<32x32xf32> -> vector<32x160xf32>
    %c0_77 = arith.constant 0 : index
    %c0_78 = arith.constant 0 : index
    %84 = vector.load %arg4[%c0_77, %c0_78] : memref<160x32xf32, #tpu.memory_space<vmem>>, vector<160x32xf32>
    %cst_79 = arith.constant dense<0.000000e+00> : vector<32x32xf32>
    %85 = tpu.matmul %83, %84, %cst_79 {dimension_numbers = #tpu.dot_dimension_numbers<[1], [0], [0], [1], [0, 0, 1, 1], [], []>} : vector<32x160xf32>, vector<160x32xf32>, vector<32x32xf32> -> vector<32x32xf32>
    %c0_80 = arith.constant 0 : index
    %c0_81 = arith.constant 0 : index
    %86 = vector.load %arg5[%c0_80, %c0_81] : memref<1x32xf32, #tpu.memory_space<vmem>>, vector<1x32xf32>
    %87 = vector.broadcast %86 : vector<1x32xf32> to vector<32x32xf32>
    %88 = arith.addf %85, %87 : vector<32x32xf32>
    %cst_82 = arith.constant 0.000000e+00 : f32
    %89 = vector.broadcast %cst_82 : f32 to vector<32x32xf32>
    %90 = arith.cmpf oge, %88, %89 : vector<32x32xf32>
    %cst_83 = arith.constant 1.000000e-01 : f32
    %91 = vector.broadcast %cst_83 : f32 to vector<32x32xf32>
    %92 = arith.mulf %91, %88 : vector<32x32xf32>
    %93 = arith.select %90, %88, %92 : vector<32x32xi1>, vector<32x32xf32>
    %94 = arith.truncf %93 : vector<32x32xf32> to vector<32x32xbf16>
    %c0_84 = arith.constant 0 : index
    %c0_85 = arith.constant 0 : index
    %c0_86 = arith.constant 0 : index
    %95 = vector.load %arg11[%c0_84, %c0_85, %c0_86] : memref<1x32x32xbf16, #tpu.memory_space<vmem>>, vector<1x32x32xbf16>
    %96 = vector.shape_cast %95 : vector<1x32x32xbf16> to vector<32x32xbf16>
    %97 = vector.shape_cast %94 : vector<32x32xbf16> to vector<1x32x32xbf16>
    tpu.vector_store %arg11[%c0_84, %c0_85, %c0_86], %97 {strides = array<i32>} : memref<1x32x32xbf16, #tpu.memory_space<vmem>>, vector<1x32x32xbf16>,
    %c2_87 = arith.constant 2 : index
    %c0_88 = arith.constant 0 : index
    %98 = vector.load %arg17[%c2_87, %c0_88] : memref<36x32xf32, #tpu.memory_space<vmem>>, vector<32x32xf32>
    tpu.vector_store %arg17[%c2_87, %c0_88], %93 {strides = array<i32>} : memref<36x32xf32, #tpu.memory_space<vmem>>, vector<32x32xf32>,
    %c0_89 = arith.constant 0 : index
    %c0_90 = arith.constant 0 : index
    %99 = tpu.strided_load %arg17[%c0_89, %c0_90] {strides = array<i32: 2, 1>} : memref<36x32xf32, #tpu.memory_space<vmem>>, vector<16x32xf32>
    %c1_91 = arith.constant 1 : index
    %c0_92 = arith.constant 0 : index
    %100 = tpu.strided_load %arg17[%c1_91, %c0_92] {strides = array<i32: 2, 1>} : memref<36x32xf32, #tpu.memory_space<vmem>>, vector<16x32xf32>
    %c2_93 = arith.constant 2 : index
    %c0_94 = arith.constant 0 : index
    %101 = tpu.strided_load %arg17[%c2_93, %c0_94] {strides = array<i32: 2, 1>} : memref<36x32xf32, #tpu.memory_space<vmem>>, vector<16x32xf32>
    %c3_95 = arith.constant 3 : index
    %c0_96 = arith.constant 0 : index
    %102 = tpu.strided_load %arg17[%c3_95, %c0_96] {strides = array<i32: 2, 1>} : memref<36x32xf32, #tpu.memory_space<vmem>>, vector<16x32xf32>
    %c4_97 = arith.constant 4 : index
    %c0_98 = arith.constant 0 : index
    %103 = tpu.strided_load %arg17[%c4_97, %c0_98] {strides = array<i32: 2, 1>} : memref<36x32xf32, #tpu.memory_space<vmem>>, vector<16x32xf32>
    %104 = tpu.concatenate %99, %100, %101, %102, %103 in 1 : vector<16x32xf32>, vector<16x32xf32>, vector<16x32xf32>, vector<16x32xf32>, vector<16x32xf32> -> vector<16x160xf32>
    %c0_99 = arith.constant 0 : index
    %c0_100 = arith.constant 0 : index
    %105 = vector.load %arg6[%c0_99, %c0_100] : memref<160x64xf32, #tpu.memory_space<vmem>>, vector<160x64xf32>
    %cst_101 = arith.constant dense<0.000000e+00> : vector<16x64xf32>
    %106 = tpu.matmul %104, %105, %cst_101 {dimension_numbers = #tpu.dot_dimension_numbers<[1], [0], [0], [1], [0, 0, 1, 1], [], []>} : vector<16x160xf32>, vector<160x64xf32>, vector<16x64xf32> -> vector<16x64xf32>
    %c0_102 = arith.constant 0 : index
    %c0_103 = arith.constant 0 : index
    %107 = vector.load %arg7[%c0_102, %c0_103] : memref<1x64xf32, #tpu.memory_space<vmem>>, vector<1x64xf32>
    %108 = vector.broadcast %107 : vector<1x64xf32> to vector<16x64xf32>
    %109 = arith.addf %106, %108 : vector<16x64xf32>
    %cst_104 = arith.constant 0.000000e+00 : f32
    %110 = vector.broadcast %cst_104 : f32 to vector<16x64xf32>
    %111 = arith.cmpf oge, %109, %110 : vector<16x64xf32>
    %cst_105 = arith.constant 1.000000e-01 : f32
    %112 = vector.broadcast %cst_105 : f32 to vector<16x64xf32>
    %113 = arith.mulf %112, %109 : vector<16x64xf32>
    %114 = arith.select %111, %109, %113 : vector<16x64xi1>, vector<16x64xf32>
    %115 = arith.truncf %114 : vector<16x64xf32> to vector<16x64xbf16>
    %c0_106 = arith.constant 0 : index
    %c0_107 = arith.constant 0 : index
    %c0_108 = arith.constant 0 : index
    %116 = vector.load %arg12[%c0_106, %c0_107, %c0_108] : memref<1x16x64xbf16, #tpu.memory_space<vmem>>, vector<1x16x64xbf16>
    %117 = vector.shape_cast %116 : vector<1x16x64xbf16> to vector<16x64xbf16>
    %118 = vector.shape_cast %115 : vector<16x64xbf16> to vector<1x16x64xbf16>
    tpu.vector_store %arg12[%c0_106, %c0_107, %c0_108], %118 {strides = array<i32>} : memref<1x16x64xbf16, #tpu.memory_space<vmem>>, vector<1x16x64xbf16>,
    %c1_109 = arith.constant 1 : index
    %c0_110 = arith.constant 0 : index
    %119 = vector.load %arg18[%c1_109, %c0_110] : memref<18x64xf32, #tpu.memory_space<vmem>>, vector<16x64xf32>
    tpu.vector_store %arg18[%c1_109, %c0_110], %114 {strides = array<i32>} : memref<18x64xf32, #tpu.memory_space<vmem>>, vector<16x64xf32>,
    %c0_111 = arith.constant 0 : index
    %c0_112 = arith.constant 0 : index
    %120 = vector.load %arg18[%c0_111, %c0_112] : memref<18x64xf32, #tpu.memory_space<vmem>>, vector<16x64xf32>
    %c0_113 = arith.constant 0 : index
    %c0_114 = arith.constant 0 : index
    %c0_115 = arith.constant 0 : index
    %121 = vector.load %arg8[%c0_113, %c0_114, %c0_115] : memref<3x1x64xf32, #tpu.memory_space<vmem>>, vector<1x1x64xf32>
    %122 = vector.shape_cast %121 : vector<1x1x64xf32> to vector<1x64xf32>
    %123 = vector.broadcast %122 : vector<1x64xf32> to vector<16x64xf32>
    %124 = arith.mulf %120, %123 : vector<16x64xf32>
    %c1_116 = arith.constant 1 : index
    %c0_117 = arith.constant 0 : index
    %125 = vector.load %arg18[%c1_116, %c0_117] : memref<18x64xf32, #tpu.memory_space<vmem>>, vector<16x64xf32>
    %c1_118 = arith.constant 1 : index
    %c0_119 = arith.constant 0 : index
    %c0_120 = arith.constant 0 : index
    %126 = vector.load %arg8[%c1_118, %c0_119, %c0_120] : memref<3x1x64xf32, #tpu.memory_space<vmem>>, vector<1x1x64xf32>
    %127 = vector.shape_cast %126 : vector<1x1x64xf32> to vector<1x64xf32>
    %128 = vector.broadcast %127 : vector<1x64xf32> to vector<16x64xf32>
    %129 = arith.mulf %125, %128 : vector<16x64xf32>
    %130 = arith.addf %124, %129 : vector<16x64xf32>
    %c2_121 = arith.constant 2 : index
    %c0_122 = arith.constant 0 : index
    %131 = vector.load %arg18[%c2_121, %c0_122] : memref<18x64xf32, #tpu.memory_space<vmem>>, vector<16x64xf32>
    %c2_123 = arith.constant 2 : index
    %c0_124 = arith.constant 0 : index
    %c0_125 = arith.constant 0 : index
    %132 = vector.load %arg8[%c2_123, %c0_124, %c0_125] : memref<3x1x64xf32, #tpu.memory_space<vmem>>, vector<1x1x64xf32>
    %133 = vector.shape_cast %132 : vector<1x1x64xf32> to vector<1x64xf32>
    %134 = vector.broadcast %133 : vector<1x64xf32> to vector<16x64xf32>
    %135 = arith.mulf %131, %134 : vector<16x64xf32>
    %136 = arith.addf %130, %135 : vector<16x64xf32>
    %cst_126 = arith.constant dense<0.000000e+00> : vector<16xf32>
    %137 = vector.multi_reduction <add>, %136, %cst_126 [1] : vector<16x64xf32> to vector<16xf32>
    %138 = vector.shape_cast %137 : vector<16xf32> to vector<16x1xf32>
    %c0_127 = arith.constant 0 : index
    %c0_128 = arith.constant 0 : index
    %139 = vector.load %arg9[%c0_127, %c0_128] : memref<1x1xf32, #tpu.memory_space<vmem>>, vector<1x1xf32>
    %140 = vector.broadcast %139 : vector<1x1xf32> to vector<16x1xf32>
    %141 = arith.addf %138, %140 : vector<16x1xf32>
    %c0_129 = arith.constant 0 : index
    %c0_130 = arith.constant 0 : index
    %c0_131 = arith.constant 0 : index
    %142 = vector.load %arg13[%c0_129, %c0_130, %c0_131] : memref<1x16x1xf32, #tpu.memory_space<vmem>>, vector<1x16x1xf32>
    %143 = vector.shape_cast %142 : vector<1x16x1xf32> to vector<16x1xf32>
    %144 = vector.shape_cast %141 : vector<16x1xf32> to vector<1x16x1xf32>
    tpu.vector_store %arg13[%c0_129, %c0_130, %c0_131], %144 {strides = array<i32>} : memref<1x16x1xf32, #tpu.memory_space<vmem>>, vector<1x16x1xf32>,
    return
  }
  func.func @transform_0(%arg0: i32) -> (i32, i32, i32) {
    %c0_i32 = arith.constant 0 : i32
    %c0_i32_0 = arith.constant 0 : i32
    %c0_i32_1 = arith.constant 0 : i32
    return %arg0, %c0_i32, %c0_i32_0 : i32, i32, i32
  }
  func.func @transform_1(%arg0: i32) -> (i32, i32, i32) {
    %c0_i32 = arith.constant 0 : i32
    %c0_i32_0 = arith.constant 0 : i32
    %c0_i32_1 = arith.constant 0 : i32
    %c0_i32_2 = arith.constant 0 : i32
    return %c0_i32, %c0_i32_0, %c0_i32_1 : i32, i32, i32
  }
  func.func @transform_2(%arg0: i32) -> (i32, i32) {
    %c0_i32 = arith.constant 0 : i32
    %c0_i32_0 = arith.constant 0 : i32
    %c0_i32_1 = arith.constant 0 : i32
    return %c0_i32, %c0_i32_0 : i32, i32
  }
  func.func @transform_3(%arg0: i32) -> (i32, i32) {
    %c0_i32 = arith.constant 0 : i32
    %c0_i32_0 = arith.constant 0 : i32
    %c0_i32_1 = arith.constant 0 : i32
    return %c0_i32, %c0_i32_0 : i32, i32
  }
  func.func @transform_4(%arg0: i32) -> (i32, i32) {
    %c0_i32 = arith.constant 0 : i32
    %c0_i32_0 = arith.constant 0 : i32
    %c0_i32_1 = arith.constant 0 : i32
    return %c0_i32, %c0_i32_0 : i32, i32
  }
  func.func @transform_5(%arg0: i32) -> (i32, i32) {
    %c0_i32 = arith.constant 0 : i32
    %c0_i32_0 = arith.constant 0 : i32
    %c0_i32_1 = arith.constant 0 : i32
    return %c0_i32, %c0_i32_0 : i32, i32
  }
  func.func @transform_6(%arg0: i32) -> (i32, i32) {
    %c0_i32 = arith.constant 0 : i32
    %c0_i32_0 = arith.constant 0 : i32
    %c0_i32_1 = arith.constant 0 : i32
    return %c0_i32, %c0_i32_0 : i32, i32
  }
  func.func @transform_7(%arg0: i32) -> (i32, i32, i32) {
    %c0_i32 = arith.constant 0 : i32
    %c0_i32_0 = arith.constant 0 : i32
    %c0_i32_1 = arith.constant 0 : i32
    %c0_i32_2 = arith.constant 0 : i32
    return %c0_i32, %c0_i32_0, %c0_i32_1 : i32, i32, i32
  }
  func.func @transform_8(%arg0: i32) -> (i32, i32) {
    %c0_i32 = arith.constant 0 : i32
    %c0_i32_0 = arith.constant 0 : i32
    %c0_i32_1 = arith.constant 0 : i32
    return %c0_i32, %c0_i32_0 : i32, i32
  }
  func.func @transform_9(%arg0: i32) -> (i32, i32, i32) {
    %c0_i32 = arith.constant 0 : i32
    %c0_i32_0 = arith.constant 0 : i32
    %c0_i32_1 = arith.constant 0 : i32
    return %arg0, %c0_i32, %c0_i32_0 : i32, i32, i32
  }
  func.func @transform_10(%arg0: i32) -> (i32, i32, i32) {
    %c0_i32 = arith.constant 0 : i32
    %c0_i32_0 = arith.constant 0 : i32
    %c0_i32_1 = arith.constant 0 : i32
    return %arg0, %c0_i32, %c0_i32_0 : i32, i32, i32
  }
  func.func @transform_11(%arg0: i32) -> (i32, i32, i32) {
    %c0_i32 = arith.constant 0 : i32
    %c0_i32_0 = arith.constant 0 : i32
    %c0_i32_1 = arith.constant 0 : i32
    return %arg0, %c0_i32, %c0_i32_0 : i32, i32, i32
  }
  func.func @transform_12(%arg0: i32) -> (i32, i32, i32) {
    %c0_i32 = arith.constant 0 : i32
    %c0_i32_0 = arith.constant 0 : i32
    %c0_i32_1 = arith.constant 0 : i32
    return %arg0, %c0_i32, %c0_i32_0 : i32, i32, i32
  }
  func.func @transform_13(%arg0: i32) -> (i32, i32, i32) {
    %c0_i32 = arith.constant 0 : i32
    %c0_i32_0 = arith.constant 0 : i32
    %c0_i32_1 = arith.constant 0 : i32
    return %arg0, %c0_i32, %c0_i32_0 : i32, i32, i32
  }
}

</mosaic_0001>

<llo_original>
// kernel: tpu_custom_call.1
$region0: #{tpu_custom_call.1}
  #allocation0 [shape = 'u32[]', space=smem, size = 0x4, offset = 0x4, fixed_abs, tag = 'smem constant byte address 0x4 - core index']
  #allocation1 [shape = 'u32[72,128]{1,0:T(1,128)}', space=vmem, size = 0x9000, scoped, tag = 'internal scratch']
  #allocation2 [shape = 'f32[68,32]{1,0:T(8,128)}', space=vmem, size = 0x9000, scoped, tag = 'scratch operand']
  #allocation3 [shape = 'f32[68,32]{1,0:T(8,128)}', space=vmem, size = 0x9000, scoped, tag = 'scratch operand']
  #allocation4 [shape = 'f32[36,32]{1,0:T(8,128)}', space=vmem, size = 0x5000, scoped, tag = 'scratch operand']
  #allocation5 [shape = 'f32[18,64]{1,0:T(8,128)}', space=vmem, size = 0x3000, scoped, tag = 'scratch operand']
  #allocation6 [shape = 'f32[1,1]{1,0:T(1,128)S(1)}', space=vmem, size = 0x200, scoped, tag = 'scoped memory for tpu_custom_call.1']
  %s0 = inlined_call_operand.vmem [shape: f32[4,64,1], index: 0, kind: input, shape index: {}]
  %s1 = inlined_call_operand.vmem [shape: f32[5,1,32], index: 1, kind: input, shape index: {}]
  %s2 = inlined_call_operand.vmem [shape: f32[1,32], index: 2, kind: input, shape index: {}]
  %s3 = inlined_call_operand.vmem [shape: f32[160,32], index: 3, kind: input, shape index: {}]
  %s4 = inlined_call_operand.vmem [shape: f32[1,32], index: 4, kind: input, shape index: {}]
  %s5 = inlined_call_operand.vmem [shape: f32[160,64], index: 5, kind: input, shape index: {}]
  %s6 = inlined_call_operand.vmem [shape: f32[1,64], index: 6, kind: input, shape index: {}]
  %s7 = inlined_call_operand.vmem [shape: f32[3,1,64], index: 7, kind: input, shape index: {}]
  %s8 = inlined_call_operand.<no memory space> [shape: f32[1,1], index: 8, kind: input, shape index: {}]
  %s9 = inlined_call_operand.vmem [shape: bf16[4,64,32], index: 9, kind: output, shape index: {0}]
  %s10 = inlined_call_operand.hbm [shape: bf16[4,32,32], index: 10, kind: output, shape index: {1}]
  %s11 = inlined_call_operand.hbm [shape: bf16[4,16,64], index: 11, kind: output, shape index: {2}]
  %s12 = inlined_call_operand.vmem [shape: f32[4,16,1], index: 12, kind: output, shape index: {3}]
  %s13 = inlined_call_operand.vmem [shape: f32[4,33,1], index: 13, kind: output, shape index: {4}]
  %14 = xla_tuple %s9, %s10, %s11, %s12, %s13
  %s15 = sld [smem:[#allocation0]]
  $region101: #{tpu_custom_call.1} parent=0
    _
  %s17 = ssub.s32 1, %s15
  %s18 = scalar_select 0, %s17, %s15
  %v19 = vstv %s8
  %20 = vst [vmem:[#allocation6] sm:$0x1] %v19
  $region1: #{tpu_custom_call.1} parent=0
    #allocation7 [shape = 'u8[16384]{0}', space=vmem, size = 0x4000, scoped, tag = 'output window, operand 1']
    #allocation8 [shape = 's32[2]{0}', space=sflag, size = 0x8, scoped, tag = 'scoped memory for tpu_custom_call.1']
    #allocation9 [shape = 'u8[8192]{0}', space=vmem, size = 0x2000, scoped, tag = 'output window, operand 2']
    #allocation10 [shape = 's32[2]{0}', space=sflag, size = 0x8, scoped, tag = 'scoped memory for tpu_custom_call.1']
    %21 = vsyncpa [#allocation8], 0
    %s22 = scalar_lea.sflag [#allocation8], 1
    %23 = vsyncpa %s22, 0
    %24 = vsyncpa [#allocation10], 0
    %s25 = scalar_lea.sflag [#allocation10], 1
    %26 = vsyncpa %s25, 0
    loop: start=0, step=1, limit=6
    $region2: #{tpu_custom_call.1} parent=1 // loop_pre_header
      _
    $region3: #{tpu_custom_call.1} parent=1 // loop_header
      %s28 = sphi 0, %s32
      %p29 = scmp.ge.s32.totalorder %s28, 6
      %s38 = sphi 0, %s40
      %s41 = sphi 0, %s38
      %s42 = sphi 0, %s41
      %s58 = sphi 0, %s42
      %s62 = sphi 0, %s62
      %s64 = sphi 0, %s62
      %s65 = sphi 0, %s64
      %s79 = sphi 0, %s65
      %s83 = sphi 0, %s83
      %s85 = sphi 0, %s83
      %s86 = sphi 0, %s85
      %s100 = sphi 0, %s86
      %s104 = sphi 0, %s104
      %s106 = sphi 0, %s104
      %s107 = sphi 0, %s106
      %s121 = sphi 0, %s107
      %s125 = sphi 0, %s125
      %s127 = sphi 0, %s125
      %s128 = sphi 0, %s127
      %s142 = sphi 0, %s128
      %s146 = sphi 0, %s146
      %s148 = sphi 0, %s146
      %s149 = sphi 0, %s148
      %s163 = sphi 0, %s149
      %s167 = sphi 0, %s167
      %s169 = sphi 0, %s167
      %s170 = sphi 0, %s169
      %s184 = sphi 0, %s170
      %s188 = sphi 0, %s188
      %s190 = sphi 0, %s188
      %s191 = sphi 0, %s190
      %s205 = sphi 0, %s191
      %s209 = sphi 0, %s209
      %s211 = sphi 0, %s209
      %s212 = sphi 0, %s211
      %s226 = sphi 0, %s212
      %s232 = sphi 0, %s234
      %s235 = sphi 0, %s232
      %s236 = sphi 0, %s235
      %s252 = sphi 0, %s236
      %s258 = sphi 0, %s260
      %s261 = sphi 0, %s258
      %s262 = sphi 0, %s261
      %s278 = sphi 0, %s262
      %s284 = sphi 0, %s286
      %s287 = sphi 0, %s284
      %s288 = sphi 0, %s287
      %s304 = sphi 0, %s288
      %s310 = sphi 0, %s312
      %s313 = sphi 0, %s310
      %s314 = sphi 0, %s313
      %s330 = sphi 0, %s314
      %s336 = sphi 0, %s338
      %s339 = sphi 0, %s336
      %s340 = sphi 0, %s339
      %s356 = sphi 0, %s340
    $region4: #{tpu_custom_call.1} parent=1 // loop_header_branch
      %31 = sbr.rel (%p29) target = $region8
    $region5: #{tpu_custom_call.1} parent=1 // loop_body
      %s33 = ssub.s32 %s28, 1
      %s34 = ssub.s32 %s28, 2
      %s35 = sadd.s32 %s28, 1
      %s36 = ssub.s32 %s28, %s35
      %p37 = scmp.eq.s32.totalorder %s36, 0
      %s39 = sadd.s32 %s38, 1
      %s40 = scalar_select %p37, %s38, %s39
      %p43 = pneg %p37
      %p44 = scmp.eq.s32.totalorder %s28, 3
      %p45 = por %p43, %p44
      %p46 = scmp.ne.s32.totalorder %s38, %s41
      %p47 = scmp.eq.s32.totalorder %s28, 0
      %p48 = por %p46, %p47
      %p49 = scmp.ne.s32.totalorder %s38, %s41
      %p50 = scmp.eq.s32.totalorder %s33, 3
      %p51 = por %p49, %p50
      %p52 = scmp.ne.s32.totalorder %s41, %s42
      %p53 = scmp.eq.s32.totalorder %s33, 0
      %p54 = por %p52, %p53
      %p55 = scmp.ne.s32.totalorder %s41, %s42
      %p56 = scmp.eq.s32.totalorder %s34, 3
      %p57 = por %p55, %p56
      %p59 = scmp.ne.s32.totalorder %s42, %s58
      %p60 = scmp.eq.s32.totalorder %s34, 0
      %p61 = por %p59, %p60
      %s63 = sadd.s32 %s62, 1
      %p66 = scmp.eq.s32.totalorder %s28, 3
      %p67 = scmp.ne.s32.totalorder %s62, %s64
      %p68 = scmp.eq.s32.totalorder %s28, 0
      %p69 = por %p67, %p68
      %p70 = scmp.ne.s32.totalorder %s62, %s64
      %p71 = scmp.eq.s32.totalorder %s33, 3
      %p72 = por %p70, %p71
      %p73 = scmp.ne.s32.totalorder %s64, %s65
      %p74 = scmp.eq.s32.totalorder %s33, 0
      %p75 = por %p73, %p74
      %p76 = scmp.ne.s32.totalorder %s64, %s65
      %p77 = scmp.eq.s32.totalorder %s34, 3
      %p78 = por %p76, %p77
      %p80 = scmp.ne.s32.totalorder %s65, %s79
      %p81 = scmp.eq.s32.totalorder %s34, 0
      %p82 = por %p80, %p81
      %s84 = sadd.s32 %s83, 1
      %p87 = scmp.eq.s32.totalorder %s28, 3
      %p88 = scmp.ne.s32.totalorder %s83, %s85
      %p89 = scmp.eq.s32.totalorder %s28, 0
      %p90 = por %p88, %p89
      %p91 = scmp.ne.s32.totalorder %s83, %s85
      %p92 = scmp.eq.s32.totalorder %s33, 3
      %p93 = por %p91, %p92
      %p94 = scmp.ne.s32.totalorder %s85, %s86
      %p95 = scmp.eq.s32.totalorder %s33, 0
      %p96 = por %p94, %p95
      %p97 = scmp.ne.s32.totalorder %s85, %s86
      %p98 = scmp.eq.s32.totalorder %s34, 3
      %p99 = por %p97, %p98
      %p101 = scmp.ne.s32.totalorder %s86, %s100
      %p102 = scmp.eq.s32.totalorder %s34, 0
      %p103 = por %p101, %p102
      %s105 = sadd.s32 %s104, 1
      %p108 = scmp.eq.s32.totalorder %s28, 3
      %p109 = scmp.ne.s32.totalorder %s104, %s106
      %p110 = scmp.eq.s32.totalorder %s28, 0
      %p111 = por %p109, %p110
      %p112 = scmp.ne.s32.totalorder %s104, %s106
      %p113 = scmp.eq.s32.totalorder %s33, 3
      %p114 = por %p112, %p113
      %p115 = scmp.ne.s32.totalorder %s106, %s107
      %p116 = scmp.eq.s32.totalorder %s33, 0
      %p117 = por %p115, %p116
      %p118 = scmp.ne.s32.totalorder %s106, %s107
      %p119 = scmp.eq.s32.totalorder %s34, 3
      %p120 = por %p118, %p119
      %p122 = scmp.ne.s32.totalorder %s107, %s121
      %p123 = scmp.eq.s32.totalorder %s34, 0
      %p124 = por %p122, %p123
      %s126 = sadd.s32 %s125, 1
      %p129 = scmp.eq.s32.totalorder %s28, 3
      %p130 = scmp.ne.s32.totalorder %s125, %s127
      %p131 = scmp.eq.s32.totalorder %s28, 0
      %p132 = por %p130, %p131
      %p133 = scmp.ne.s32.totalorder %s125, %s127
      %p134 = scmp.eq.s32.totalorder %s33, 3
      %p135 = por %p133, %p134
      %p136 = scmp.ne.s32.totalorder %s127, %s128
      %p137 = scmp.eq.s32.totalorder %s33, 0
      %p138 = por %p136, %p137
      %p139 = scmp.ne.s32.totalorder %s127, %s128
      %p140 = scmp.eq.s32.totalorder %s34, 3
      %p141 = por %p139, %p140
      %p143 = scmp.ne.s32.totalorder %s128, %s142
      %p144 = scmp.eq.s32.totalorder %s34, 0
      %p145 = por %p143, %p144
      %s147 = sadd.s32 %s146, 1
      %p150 = scmp.eq.s32.totalorder %s28, 3
      %p151 = scmp.ne.s32.totalorder %s146, %s148
      %p152 = scmp.eq.s32.totalorder %s28, 0
      %p153 = por %p151, %p152
      %p154 = scmp.ne.s32.totalorder %s146, %s148
      %p155 = scmp.eq.s32.totalorder %s33, 3
      %p156 = por %p154, %p155
      %p157 = scmp.ne.s32.totalorder %s148, %s149
      %p158 = scmp.eq.s32.totalorder %s33, 0
      %p159 = por %p157, %p158
      %p160 = scmp.ne.s32.totalorder %s148, %s149
      %p161 = scmp.eq.s32.totalorder %s34, 3
      %p162 = por %p160, %p161
      %p164 = scmp.ne.s32.totalorder %s149, %s163
      %p165 = scmp.eq.s32.totalorder %s34, 0
      %p166 = por %p164, %p165
      %s168 = sadd.s32 %s167, 1
      %p171 = scmp.eq.s32.totalorder %s28, 3
      %p172 = scmp.ne.s32.totalorder %s167, %s169
      %p173 = scmp.eq.s32.totalorder %s28, 0
      %p174 = por %p172, %p173
      %p175 = scmp.ne.s32.totalorder %s167, %s169
      %p176 = scmp.eq.s32.totalorder %s33, 3
      %p177 = por %p175, %p176
      %p178 = scmp.ne.s32.totalorder %s169, %s170
      %p179 = scmp.eq.s32.totalorder %s33, 0
      %p180 = por %p178, %p179
      %p181 = scmp.ne.s32.totalorder %s169, %s170
      %p182 = scmp.eq.s32.totalorder %s34, 3
      %p183 = por %p181, %p182
      %p185 = scmp.ne.s32.totalorder %s170, %s184
      %p186 = scmp.eq.s32.totalorder %s34, 0
      %p187 = por %p185, %p186
      %s189 = sadd.s32 %s188, 1
      %p192 = scmp.eq.s32.totalorder %s28, 3
      %p193 = scmp.ne.s32.totalorder %s188, %s190
      %p194 = scmp.eq.s32.totalorder %s28, 0
      %p195 = por %p193, %p194
      %p196 = scmp.ne.s32.totalorder %s188, %s190
      %p197 = scmp.eq.s32.totalorder %s33, 3
      %p198 = por %p196, %p197
      %p199 = scmp.ne.s32.totalorder %s190, %s191
      %p200 = scmp.eq.s32.totalorder %s33, 0
      %p201 = por %p199, %p200
      %p202 = scmp.ne.s32.totalorder %s190, %s191
      %p203 = scmp.eq.s32.totalorder %s34, 3
      %p204 = por %p202, %p203
      %p206 = scmp.ne.s32.totalorder %s191, %s205
      %p207 = scmp.eq.s32.totalorder %s34, 0
      %p208 = por %p206, %p207
      %s210 = sadd.s32 %s209, 1
      %p213 = scmp.eq.s32.totalorder %s28, 3
      %p214 = scmp.ne.s32.totalorder %s209, %s211
      %p215 = scmp.eq.s32.totalorder %s28, 0
      %p216 = por %p214, %p215
      %p217 = scmp.ne.s32.totalorder %s209, %s211
      %p218 = scmp.eq.s32.totalorder %s33, 3
      %p219 = por %p217, %p218
      %p220 = scmp.ne.s32.totalorder %s211, %s212
      %p221 = scmp.eq.s32.totalorder %s33, 0
      %p222 = por %p220, %p221
      %p223 = scmp.ne.s32.totalorder %s211, %s212
      %p224 = scmp.eq.s32.totalorder %s34, 3
      %p225 = por %p223, %p224
      %p227 = scmp.ne.s32.totalorder %s212, %s226
      %p228 = scmp.eq.s32.totalorder %s34, 0
      %p229 = por %p227, %p228
      %s230 = ssub.s32 %s28, %s35
      %p231 = scmp.eq.s32.totalorder %s230, 0
      %s233 = sadd.s32 %s232, 1
      %s234 = scalar_select %p231, %s232, %s233
      %p237 = pneg %p231
      %p238 = scmp.eq.s32.totalorder %s28, 3
      %p239 = por %p237, %p238
      %p240 = scmp.ne.s32.totalorder %s232, %s235
      %p241 = scmp.eq.s32.totalorder %s28, 0
      %p242 = por %p240, %p241
      %p243 = scmp.ne.s32.totalorder %s232, %s235
      %p244 = scmp.eq.s32.totalorder %s33, 3
      %p245 = por %p243, %p244
      %p246 = scmp.ne.s32.totalorder %s235, %s236
      %p247 = scmp.eq.s32.totalorder %s33, 0
      %p248 = por %p246, %p247
      %p249 = scmp.ne.s32.totalorder %s235, %s236
      %p250 = scmp.eq.s32.totalorder %s34, 3
      %p251 = por %p249, %p250
      %p253 = scmp.ne.s32.totalorder %s236, %s252
      %p254 = scmp.eq.s32.totalorder %s34, 0
      %p255 = por %p253, %p254
      %s256 = ssub.s32 %s28, %s35
      %p257 = scmp.eq.s32.totalorder %s256, 0
      %s259 = sadd.s32 %s258, 1
      %s260 = scalar_select %p257, %s258, %s259
      %p263 = pneg %p257
      %p264 = scmp.eq.s32.totalorder %s28, 3
      %p265 = por %p263, %p264
      %p266 = scmp.ne.s32.totalorder %s258, %s261
      %p267 = scmp.eq.s32.totalorder %s28, 0
      %p268 = por %p266, %p267
      %p269 = scmp.ne.s32.totalorder %s258, %s261
      %p270 = scmp.eq.s32.totalorder %s33, 3
      %p271 = por %p269, %p270
      %p272 = scmp.ne.s32.totalorder %s261, %s262
      %p273 = scmp.eq.s32.totalorder %s33, 0
      %p274 = por %p272, %p273
      %p275 = scmp.ne.s32.totalorder %s261, %s262
      %p276 = scmp.eq.s32.totalorder %s34, 3
      %p277 = por %p275, %p276
      %p279 = scmp.ne.s32.totalorder %s262, %s278
      %p280 = scmp.eq.s32.totalorder %s34, 0
      %p281 = por %p279, %p280
      %s282 = ssub.s32 %s28, %s35
      %p283 = scmp.eq.s32.totalorder %s282, 0
      %s285 = sadd.s32 %s284, 1
      %s286 = scalar_select %p283, %s284, %s285
      %p289 = pneg %p283
      %p290 = scmp.eq.s32.totalorder %s28, 3
      %p291 = por %p289, %p290
      %p292 = scmp.ne.s32.totalorder %s284, %s287
      %p293 = scmp.eq.s32.totalorder %s28, 0
      %p294 = por %p292, %p293
      %p295 = scmp.ne.s32.totalorder %s284, %s287
      %p296 = scmp.eq.s32.totalorder %s33, 3
      %p297 = por %p295, %p296
      %p298 = scmp.ne.s32.totalorder %s287, %s288
      %p299 = scmp.eq.s32.totalorder %s33, 0
      %p300 = por %p298, %p299
      %p301 = scmp.ne.s32.totalorder %s287, %s288
      %p302 = scmp.eq.s32.totalorder %s34, 3
      %p303 = por %p301, %p302
      %p305 = scmp.ne.s32.totalorder %s288, %s304
      %p306 = scmp.eq.s32.totalorder %s34, 0
      %p307 = por %p305, %p306
      %s308 = ssub.s32 %s28, %s35
      %p309 = scmp.eq.s32.totalorder %s308, 0
      %s311 = sadd.s32 %s310, 1
      %s312 = scalar_select %p309, %s310, %s311
      %p315 = pneg %p309
      %p316 = scmp.eq.s32.totalorder %s28, 3
      %p317 = por %p315, %p316
      %p318 = scmp.ne.s32.totalorder %s310, %s313
      %p319 = scmp.eq.s32.totalorder %s28, 0
      %p320 = por %p318, %p319
      %p321 = scmp.ne.s32.totalorder %s310, %s313
      %p322 = scmp.eq.s32.totalorder %s33, 3
      %p323 = por %p321, %p322
      %p324 = scmp.ne.s32.totalorder %s313, %s314
      %p325 = scmp.eq.s32.totalorder %s33, 0
      %p326 = por %p324, %p325
      %p327 = scmp.ne.s32.totalorder %s313, %s314
      %p328 = scmp.eq.s32.totalorder %s34, 3
      %p329 = por %p327, %p328
      %p331 = scmp.ne.s32.totalorder %s314, %s330
      %p332 = scmp.eq.s32.totalorder %s34, 0
      %p333 = por %p331, %p332
      %s334 = ssub.s32 %s28, %s35
      %p335 = scmp.eq.s32.totalorder %s334, 0
      %s337 = sadd.s32 %s336, 1
      %s338 = scalar_select %p335, %s336, %s337
      %p341 = pneg %p335
      %p342 = scmp.eq.s32.totalorder %s28, 3
      %p343 = por %p341, %p342
      %p344 = scmp.ne.s32.totalorder %s336, %s339
      %p345 = scmp.eq.s32.totalorder %s28, 0
      %p346 = por %p344, %p345
      %p347 = scmp.ne.s32.totalorder %s336, %s339
      %p348 = scmp.eq.s32.totalorder %s33, 3
      %p349 = por %p347, %p348
      %p350 = scmp.ne.s32.totalorder %s339, %s340
      %p351 = scmp.eq.s32.totalorder %s33, 0
      %p352 = por %p350, %p351
      %p353 = scmp.ne.s32.totalorder %s339, %s340
      %p354 = scmp.eq.s32.totalorder %s34, 3
      %p355 = por %p353, %p354
      %p357 = scmp.ne.s32.totalorder %s340, %s356
      %p358 = scmp.eq.s32.totalorder %s34, 0
      %p359 = por %p357, %p358
      %p360 = scmp.le.s32.totalorder 1, %s28
      %p361 = scmp.lt.s32.totalorder %s28, 5
      %p362 = pnand %p360, %p361
      %p363 = pneg %p362
      // Predicated region
      $region9: #{tpu_custom_call.1} parent=5 // pred_check
        _
      $region10: #{tpu_custom_call.1} parent=5 // pred_check_branch
        %365 = sbr.rel (%p362) target = $region12
      $region11: #{tpu_custom_call.1} parent=5 // pred_region
        %s366 = ssub.s32 %s28, 1
        // Predicated region
        $region13: #{tpu_custom_call.1} parent=11 // pred_check
          %p367 = pneg %p75
        $region14: #{tpu_custom_call.1} parent=11 // pred_check_branch
          %369 = sbr.rel (%p367) target = $region16
        $region15: #{tpu_custom_call.1} parent=11 // pred_region
          _
        $region16: #{tpu_custom_call.1} parent=11 // pred_fallthru
          _
        // Predicated region
        $region17: #{tpu_custom_call.1} parent=11 // pred_check
          %p370 = pneg %p96
        $region18: #{tpu_custom_call.1} parent=11 // pred_check_branch
          %372 = sbr.rel (%p370) target = $region20
        $region19: #{tpu_custom_call.1} parent=11 // pred_region
          _
        $region20: #{tpu_custom_call.1} parent=11 // pred_fallthru
          _
        // Predicated region
        $region21: #{tpu_custom_call.1} parent=11 // pred_check
          %p373 = pneg %p117
        $region22: #{tpu_custom_call.1} parent=11 // pred_check_branch
          %375 = sbr.rel (%p373) target = $region24
        $region23: #{tpu_custom_call.1} parent=11 // pred_region
          _
        $region24: #{tpu_custom_call.1} parent=11 // pred_fallthru
          _
        // Predicated region
        $region25: #{tpu_custom_call.1} parent=11 // pred_check
          %p376 = pneg %p138
        $region26: #{tpu_custom_call.1} parent=11 // pred_check_branch
          %378 = sbr.rel (%p376) target = $region28
        $region27: #{tpu_custom_call.1} parent=11 // pred_region
          _
        $region28: #{tpu_custom_call.1} parent=11 // pred_fallthru
          _
        // Predicated region
        $region29: #{tpu_custom_call.1} parent=11 // pred_check
          %p379 = pneg %p159
        $region30: #{tpu_custom_call.1} parent=11 // pred_check_branch
          %381 = sbr.rel (%p379) target = $region32
        $region31: #{tpu_custom_call.1} parent=11 // pred_region
          _
        $region32: #{tpu_custom_call.1} parent=11 // pred_fallthru
          _
        // Predicated region
        $region33: #{tpu_custom_call.1} parent=11 // pred_check
          %p382 = pneg %p180
        $region34: #{tpu_custom_call.1} parent=11 // pred_check_branch
          %384 = sbr.rel (%p382) target = $region36
        $region35: #{tpu_custom_call.1} parent=11 // pred_region
          _
        $region36: #{tpu_custom_call.1} parent=11 // pred_fallthru
          _
        // Predicated region
        $region37: #{tpu_custom_call.1} parent=11 // pred_check
          %p385 = pneg %p201
        $region38: #{tpu_custom_call.1} parent=11 // pred_check_branch
          %387 = sbr.rel (%p385) target = $region40
        $region39: #{tpu_custom_call.1} parent=11 // pred_region
          _
        $region40: #{tpu_custom_call.1} parent=11 // pred_fallthru
          _
        // Predicated region
        $region41: #{tpu_custom_call.1} parent=11 // pred_check
          %p388 = pneg %p222
        $region42: #{tpu_custom_call.1} parent=11 // pred_check_branch
          %390 = sbr.rel (%p388) target = $region44
        $region43: #{tpu_custom_call.1} parent=11 // pred_region
          _
        $region44: #{tpu_custom_call.1} parent=11 // pred_fallthru
          _
      $region12: #{tpu_custom_call.1} parent=5 // pred_fallthru
        _
      %p391 = scmp.lt.s32.totalorder %s28, 4
      // Predicated region
      $region45: #{tpu_custom_call.1} parent=5 // pred_check
        %p392 = pneg %p391
      $region46: #{tpu_custom_call.1} parent=5 // pred_check_branch
        %394 = sbr.rel (%p392) target = $region48
      $region47: #{tpu_custom_call.1} parent=5 // pred_region
        // Predicated region
        $region49: #{tpu_custom_call.1} parent=47 // pred_check
          %p395 = pneg %p48
        $region50: #{tpu_custom_call.1} parent=47 // pred_check_branch
          %397 = sbr.rel (%p395) target = $region52
        $region51: #{tpu_custom_call.1} parent=47 // pred_region
          %p398 = scmp.lt.s32.totalorder %s28, 3
          %s399 = scalar_select %p398, %s28, 3
          %s400 = smul.addr %s399, 8
          %s401 = smul.addr %s400, 8
          %s402 = scalar_lea.vmem %s0, %s401
        $region52: #{tpu_custom_call.1} parent=47 // pred_fallthru
          _
      $region48: #{tpu_custom_call.1} parent=5 // pred_fallthru
        _
      %p403 = scmp.le.s32.totalorder 1, %s28
      %p404 = scmp.lt.s32.totalorder %s28, 5
      %p405 = pnand %p403, %p404
      %p406 = pneg %p405
      // Predicated region
      $region53: #{tpu_custom_call.1} parent=5 // pred_check
        _
      $region54: #{tpu_custom_call.1} parent=5 // pred_check_branch
        %408 = sbr.rel (%p405) target = $region56
      $region55: #{tpu_custom_call.1} parent=5 // pred_region
        %s409 = ssub.s32 %s28, 1
        %p410 = scmp.lt.s32.totalorder %s33, 3
        %s411 = scalar_select %p410, %s33, 3
        %s412 = smul.addr %s411, 8
        %s413 = smul.addr %s412, 8
        %s414 = scalar_lea.vmem %s0, %s413
        %p415 = pneg %p54
        %p416 = pneg %p51
        %p417 = pneg %p75
        %p418 = pneg %p72
        %p419 = pneg %p96
        %p420 = pneg %p93
        %p421 = pneg %p117
        %p422 = pneg %p114
        %p423 = pneg %p138
        %p424 = pneg %p135
        %p425 = pneg %p159
        %p426 = pneg %p156
        %p427 = pneg %p180
        %p428 = pneg %p177
        %p429 = pneg %p201
        %p430 = pneg %p198
        %p431 = pneg %p222
        %p432 = pneg %p219
        %p433 = pneg %p248
        %p434 = pneg %p245
        %p435 = scmp.lt.s32.totalorder %s33, 3
        %s436 = scalar_select %p435, %s33, 3
        %s437 = smul.addr %s436, 8
        %s438 = smul.addr %s437, 4
        %s439 = scalar_lea.vmem %s9, %s438
        %p440 = pneg %p274
        %p441 = pneg %p271
        %s442 = sand.u32 %s261, 1
        %s443 = scalar_lea.sflag [#allocation8], %s442
        %s444 = sand.u32 %s261, 1
        %s445 = smul.addr %s444, 16
        %s446 = scalar_lea.vmem [#allocation7], %s445
        %p447 = pneg %p300
        %p448 = pneg %p297
        %s449 = sand.u32 %s287, 1
        %s450 = scalar_lea.sflag [#allocation10], %s449
        %s451 = sand.u32 %s287, 1
        %s452 = smul.addr %s451, 8
        %s453 = scalar_lea.vmem [#allocation9], %s452
        %p454 = pneg %p326
        %p455 = pneg %p323
        %p456 = scmp.lt.s32.totalorder %s33, 3
        %s457 = scalar_select %p456, %s33, 3
        %s458 = smul.addr %s457, 2
        %s459 = smul.addr %s458, 8
        %s460 = scalar_lea.vmem %s12, %s459
        %p461 = pneg %p352
        %p462 = pneg %p349
        %p463 = scmp.lt.s32.totalorder %s33, 3
        %s464 = scalar_select %p463, %s33, 3
        %s465 = smul.addr %s464, 5
        %s466 = smul.addr %s465, 8
        %s467 = scalar_lea.vmem %s13, %s466
        %p468 = scmp.lt.s32.totalorder %s33, 3
        %s469 = scalar_select %p468, %s33, 3
        %s470 = smul.addr %s469, 8
        %s471 = smul.addr %s470, 8
        %s472 = scalar_lea.vmem %s0, %s471
        %p473 = scmp.lt.s32.totalorder %s33, 3
        %s474 = scalar_select %p473, %s33, 3
        %s475 = smul.addr %s474, 8
        %s476 = smul.addr %s475, 4
        %s477 = scalar_lea.vmem %s9, %s476
        %p478 = scmp.lt.s32.totalorder %s33, 3
        %s479 = scalar_select %p478, %s33, 3
        %s480 = smul.addr %s479, 2
        %s481 = smul.addr %s480, 8
        %s482 = scalar_lea.vmem %s12, %s481
        %p483 = scmp.lt.s32.totalorder %s33, 3
        %s484 = scalar_select %p483, %s33, 3
        %s485 = smul.addr %s484, 5
        %s486 = smul.addr %s485, 8
        %s487 = scalar_lea.vmem %s13, %s486
        %vm488 = vcmask 254976
        %489 = vst.msk [vmem:[#allocation2] sm:$0x3] %vm488, 0.0
        %490 = vst.msk [vmem:[#allocation2 + $0x42] sm:$0x3] %vm488, 0.0
        %491 = vst.msk [vmem:[#allocation3] sm:$0x3] %vm488, 0.0
        %492 = vst.msk [vmem:[#allocation3 + $0x42] sm:$0x3] %vm488, 0.0
        %493 = vst.msk [vmem:[#allocation4] sm:$0x3] %vm488, 0.0
        %494 = vst.msk [vmem:[#allocation4 + $0x22] sm:$0x3] %vm488, 0.0
        %vm495 = vcmask 516096
        %496 = vst.msk [vmem:[#allocation5] sm:$0x1] %vm495, 0.0
        %497 = vst.msk [vmem:[#allocation5 + $0x11] sm:$0x1] %vm495, 0.0
        %v498 = vld [vmem:[%s472] sm:$0xff]
        %v499 = vld [vmem:[%s472 + $0x8] sm:$0xff]
        %v500 = vld [vmem:[%s472 + $0x10] sm:$0xff]
        %v501 = vld [vmem:[%s472 + $0x18] sm:$0xff]
        %v502 = vld [vmem:[%s472 + $0x20] sm:$0xff]
        %v503 = vld [vmem:[%s472 + $0x28] sm:$0xff]
        %v504 = vld [vmem:[%s472 + $0x30] sm:$0xff]
        %v505 = vld [vmem:[%s472 + $0x38] sm:$0xff]
        %507 = vset.pattern.permute.xlu0 0
        %508 = vperm.xlu0 %507, %v498
        %v509 = vpop.permute.xlu0 %508
        %512 = vset.pattern.permute.xlu0 0
        %513 = vperm.xlu0 %512, %v499
        %v514 = vpop.permute.xlu0 %513
        %517 = vset.pattern.permute.xlu0 0
        %518 = vperm.xlu0 %517, %v500
        %v519 = vpop.permute.xlu0 %518
        %522 = vset.pattern.permute.xlu0 0
        %523 = vperm.xlu0 %522, %v501
        %v524 = vpop.permute.xlu0 %523
        %527 = vset.pattern.permute.xlu0 0
        %528 = vperm.xlu0 %527, %v502
        %v529 = vpop.permute.xlu0 %528
        %532 = vset.pattern.permute.xlu0 0
        %533 = vperm.xlu0 %532, %v503
        %v534 = vpop.permute.xlu0 %533
        %537 = vset.pattern.permute.xlu0 0
        %538 = vperm.xlu0 %537, %v504
        %v539 = vpop.permute.xlu0 %538
        %542 = vset.pattern.permute.xlu0 0
        %543 = vperm.xlu0 %542, %v505
        %v544 = vpop.permute.xlu0 %543
        %vm546 = vcmask 261120
        %547 = vst.msk [vmem:[#allocation2 + $0x2] sm:$0xff] %vm546, %v509
        %548 = vst.msk [vmem:[#allocation2 + $0xa] sm:$0xff] %vm546, %v514
        %549 = vst.msk [vmem:[#allocation2 + $0x12] sm:$0xff] %vm546, %v519
        %550 = vst.msk [vmem:[#allocation2 + $0x1a] sm:$0xff] %vm546, %v524
        %551 = vst.msk [vmem:[#allocation2 + $0x22] sm:$0xff] %vm546, %v529
        %552 = vst.msk [vmem:[#allocation2 + $0x2a] sm:$0xff] %vm546, %v534
        %553 = vst.msk [vmem:[#allocation2 + $0x32] sm:$0xff] %vm546, %v539
        %554 = vst.msk [vmem:[#allocation2 + $0x3a] sm:$0xff] %vm546, %v544
        %v555 = vld [vmem:[#allocation2] ss:$2 sm:$0xff]
        %s556 = scalar_lea.vmem [#allocation2], 16
        %v557 = vld [vmem:[%s556] ss:$2 sm:$0xff]
        %s558 = scalar_lea.vmem [#allocation2], 32
        %v559 = vld [vmem:[%s558] ss:$2 sm:$0xff]
        %s560 = scalar_lea.vmem [#allocation2], 48
        %v561 = vld [vmem:[%s560] ss:$2 sm:$0xff]
        %s562 = scalar_lea.vmem [#allocation2], 64
        %v563 = vld [vmem:[%s562] ss:$2 sm:$0x1]
        %s564 = scalar_lea.vmem [#allocation2], 1
        %v565 = vld [vmem:[%s564] ss:$2 sm:$0xff]
        %s566 = scalar_lea.vmem [#allocation2], 17
        %v567 = vld [vmem:[%s566] ss:$2 sm:$0xff]
        %s568 = scalar_lea.vmem [#allocation2], 33
        %v569 = vld [vmem:[%s568] ss:$2 sm:$0xff]
        %s570 = scalar_lea.vmem [#allocation2], 49
        %v571 = vld [vmem:[%s570] ss:$2 sm:$0xff]
        %s572 = scalar_lea.vmem [#allocation2], 65
        %v573 = vld [vmem:[%s572] ss:$2 sm:$0x1]
        %v574 = vadd.f32 %v555, %v565
        %v575 = vadd.f32 %v557, %v567
        %v576 = vadd.f32 %v559, %v569
        %v577 = vadd.f32 %v561, %v571
        %v578 = vadd.f32 %v563, %v573
        %s579 = scalar_lea.vmem [#allocation2], 2
        %v580 = vld [vmem:[%s579] ss:$2 sm:$0xff]
        %s581 = scalar_lea.vmem [#allocation2], 18
        %v582 = vld [vmem:[%s581] ss:$2 sm:$0xff]
        %s583 = scalar_lea.vmem [#allocation2], 34
        %v584 = vld [vmem:[%s583] ss:$2 sm:$0xff]
        %s585 = scalar_lea.vmem [#allocation2], 50
        %v586 = vld [vmem:[%s585] ss:$2 sm:$0xff]
        %s587 = scalar_lea.vmem [#allocation2], 66
        %v588 = vld [vmem:[%s587] ss:$2 sm:$0x1]
        %v589 = vadd.f32 %v574, %v580
        %v590 = vadd.f32 %v575, %v582
        %v591 = vadd.f32 %v576, %v584
        %v592 = vadd.f32 %v577, %v586
        %v593 = vadd.f32 %v578, %v588
        %s594 = scalar_lea.vmem [#allocation2], 3
        %v595 = vld [vmem:[%s594] ss:$2 sm:$0xff]
        %s596 = scalar_lea.vmem [#allocation2], 19
        %v597 = vld [vmem:[%s596] ss:$2 sm:$0xff]
        %s598 = scalar_lea.vmem [#allocation2], 35
        %v599 = vld [vmem:[%s598] ss:$2 sm:$0xff]
        %s600 = scalar_lea.vmem [#allocation2], 51
        %v601 = vld [vmem:[%s600] ss:$2 sm:$0xff]
        %s602 = scalar_lea.vmem [#allocation2], 67
        %v603 = vld [vmem:[%s602] ss:$2 sm:$0x1]
        %v604 = vadd.f32 %v589, %v595
        %v605 = vadd.f32 %v590, %v597
        %v606 = vadd.f32 %v591, %v599
        %v607 = vadd.f32 %v592, %v601
        %v608 = vadd.f32 %v593, %v603
        %v609 = vmul.f32 %v604, 0.25
        %v610 = vmul.f32 %v605, 0.25
        %v611 = vmul.f32 %v606, 0.25
        %v612 = vmul.f32 %v607, 0.25
        %v613 = vmul.f32 %v608, 0.25
        %vm614 = vcmask 7168
        %615 = vst.msk [vmem:[%s487] sm:$0xff] %vm614, %v609
        %616 = vst.msk [vmem:[%s487 + $0x8] sm:$0xff] %vm614, %v610
        %617 = vst.msk [vmem:[%s487 + $0x10] sm:$0xff] %vm614, %v611
        %618 = vst.msk [vmem:[%s487 + $0x18] sm:$0xff] %vm614, %v612
        %vm619 = vcmask 0
        %620 = vst.msk [vmem:[%s487 + $0x20] sm:$0x1] %vm619, %v613
        %v621 = vld [vmem:[#allocation2] sm:$0xff]
        %v622 = vld [vmem:[#allocation2 + $0x8] sm:$0xff]
        %v623 = vld [vmem:[#allocation2 + $0x10] sm:$0xff]
        %v624 = vld [vmem:[#allocation2 + $0x18] sm:$0xff]
        %v625 = vld [vmem:[#allocation2 + $0x20] sm:$0xff]
        %v626 = vld [vmem:[#allocation2 + $0x28] sm:$0xff]
        %v627 = vld [vmem:[#allocation2 + $0x30] sm:$0xff]
        %v628 = vld [vmem:[#allocation2 + $0x38] sm:$0xff]
        %v629 = vld [vmem:[%s1] sm:$0x1]
        %v631 = vperm.slane %v629, 0
        %v633 = vmul.f32 %v621, %v631
        %v634 = vmul.f32 %v622, %v631
        %v635 = vmul.f32 %v623, %v631
        %v636 = vmul.f32 %v624, %v631
        %v637 = vmul.f32 %v625, %v631
        %v638 = vmul.f32 %v626, %v631
        %v639 = vmul.f32 %v627, %v631
        %v640 = vmul.f32 %v628, %v631
        %v641 = vadd.f32 %v633, 0.0
        %v642 = vadd.f32 %v634, 0.0
        %v643 = vadd.f32 %v635, 0.0
        %v644 = vadd.f32 %v636, 0.0
        %v645 = vadd.f32 %v637, 0.0
        %v646 = vadd.f32 %v638, 0.0
        %v647 = vadd.f32 %v639, 0.0
        %v648 = vadd.f32 %v640, 0.0
        %v649 = vld [vmem:[#allocation2 + $0x1] sm:$0xff]
        %v650 = vld [vmem:[#allocation2 + $0x9] sm:$0xff]
        %v651 = vld [vmem:[#allocation2 + $0x11] sm:$0xff]
        %v652 = vld [vmem:[#allocation2 + $0x19] sm:$0xff]
        %v653 = vld [vmem:[#allocation2 + $0x21] sm:$0xff]
        %v654 = vld [vmem:[#allocation2 + $0x29] sm:$0xff]
        %v655 = vld [vmem:[#allocation2 + $0x31] sm:$0xff]
        %v656 = vld [vmem:[#allocation2 + $0x39] sm:$0xff]
        %s657 = scalar_lea.vmem %s1, 1
        %v658 = vld [vmem:[%s657] sm:$0x1]
        %v660 = vperm.slane %v658, 0
        %v662 = vmul.f32 %v649, %v660
        %v663 = vmul.f32 %v650, %v660
        %v664 = vmul.f32 %v651, %v660
        %v665 = vmul.f32 %v652, %v660
        %v666 = vmul.f32 %v653, %v660
        %v667 = vmul.f32 %v654, %v660
        %v668 = vmul.f32 %v655, %v660
        %v669 = vmul.f32 %v656, %v660
        %v670 = vadd.f32 %v641, %v662
        %v671 = vadd.f32 %v642, %v663
        %v672 = vadd.f32 %v643, %v664
        %v673 = vadd.f32 %v644, %v665
        %v674 = vadd.f32 %v645, %v666
        %v675 = vadd.f32 %v646, %v667
        %v676 = vadd.f32 %v647, %v668
        %v677 = vadd.f32 %v648, %v669
        %v678 = vld [vmem:[#allocation2 + $0x2] sm:$0xff]
        %v679 = vld [vmem:[#allocation2 + $0xa] sm:$0xff]
        %v680 = vld [vmem:[#allocation2 + $0x12] sm:$0xff]
        %v681 = vld [vmem:[#allocation2 + $0x1a] sm:$0xff]
        %v682 = vld [vmem:[#allocation2 + $0x22] sm:$0xff]
        %v683 = vld [vmem:[#allocation2 + $0x2a] sm:$0xff]
        %v684 = vld [vmem:[#allocation2 + $0x32] sm:$0xff]
        %v685 = vld [vmem:[#allocation2 + $0x3a] sm:$0xff]
        %s686 = scalar_lea.vmem %s1, 2
        %v687 = vld [vmem:[%s686] sm:$0x1]
        %v689 = vperm.slane %v687, 0
        %v691 = vmul.f32 %v678, %v689
        %v692 = vmul.f32 %v679, %v689
        %v693 = vmul.f32 %v680, %v689
        %v694 = vmul.f32 %v681, %v689
        %v695 = vmul.f32 %v682, %v689
        %v696 = vmul.f32 %v683, %v689
        %v697 = vmul.f32 %v684, %v689
        %v698 = vmul.f32 %v685, %v689
        %v699 = vadd.f32 %v670, %v691
        %v700 = vadd.f32 %v671, %v692
        %v701 = vadd.f32 %v672, %v693
        %v702 = vadd.f32 %v673, %v694
        %v703 = vadd.f32 %v674, %v695
        %v704 = vadd.f32 %v675, %v696
        %v705 = vadd.f32 %v676, %v697
        %v706 = vadd.f32 %v677, %v698
        %v707 = vld [vmem:[#allocation2 + $0x3] sm:$0xff]
        %v708 = vld [vmem:[#allocation2 + $0xb] sm:$0xff]
        %v709 = vld [vmem:[#allocation2 + $0x13] sm:$0xff]
        %v710 = vld [vmem:[#allocation2 + $0x1b] sm:$0xff]
        %v711 = vld [vmem:[#allocation2 + $0x23] sm:$0xff]
        %v712 = vld [vmem:[#allocation2 + $0x2b] sm:$0xff]
        %v713 = vld [vmem:[#allocation2 + $0x33] sm:$0xff]
        %v714 = vld [vmem:[#allocation2 + $0x3b] sm:$0xff]
        %s715 = scalar_lea.vmem %s1, 3
        %v716 = vld [vmem:[%s715] sm:$0x1]
        %v718 = vperm.slane %v716, 0
        %v720 = vmul.f32 %v707, %v718
        %v721 = vmul.f32 %v708, %v718
        %v722 = vmul.f32 %v709, %v718
        %v723 = vmul.f32 %v710, %v718
        %v724 = vmul.f32 %v711, %v718
        %v725 = vmul.f32 %v712, %v718
        %v726 = vmul.f32 %v713, %v718
        %v727 = vmul.f32 %v714, %v718
        %v728 = vadd.f32 %v699, %v720
        %v729 = vadd.f32 %v700, %v721
        %v730 = vadd.f32 %v701, %v722
        %v731 = vadd.f32 %v702, %v723
        %v732 = vadd.f32 %v703, %v724
        %v733 = vadd.f32 %v704, %v725
        %v734 = vadd.f32 %v705, %v726
        %v735 = vadd.f32 %v706, %v727
        %v736 = vld [vmem:[#allocation2 + $0x4] sm:$0xff]
        %v737 = vld [vmem:[#allocation2 + $0xc] sm:$0xff]
        %v738 = vld [vmem:[#allocation2 + $0x14] sm:$0xff]
        %v739 = vld [vmem:[#allocation2 + $0x1c] sm:$0xff]
        %v740 = vld [vmem:[#allocation2 + $0x24] sm:$0xff]
        %v741 = vld [vmem:[#allocation2 + $0x2c] sm:$0xff]
        %v742 = vld [vmem:[#allocation2 + $0x34] sm:$0xff]
        %v743 = vld [vmem:[#allocation2 + $0x3c] sm:$0xff]
        %s744 = scalar_lea.vmem %s1, 4
        %v745 = vld [vmem:[%s744] sm:$0x1]
        %v747 = vperm.slane %v745, 0
        %v749 = vmul.f32 %v736, %v747
        %v750 = vmul.f32 %v737, %v747
        %v751 = vmul.f32 %v738, %v747
        %v752 = vmul.f32 %v739, %v747
        %v753 = vmul.f32 %v740, %v747
        %v754 = vmul.f32 %v741, %v747
        %v755 = vmul.f32 %v742, %v747
        %v756 = vmul.f32 %v743, %v747
        %v757 = vadd.f32 %v728, %v749
        %v758 = vadd.f32 %v729, %v750
        %v759 = vadd.f32 %v730, %v751
        %v760 = vadd.f32 %v731, %v752
        %v761 = vadd.f32 %v732, %v753
        %v762 = vadd.f32 %v733, %v754
        %v763 = vadd.f32 %v734, %v755
        %v764 = vadd.f32 %v735, %v756
        %v765 = vld [vmem:[%s2] sm:$0x1]
        %v767 = vperm.slane %v765, 0
        %v769 = vadd.f32 %v757, %v767
        %v770 = vadd.f32 %v758, %v767
        %v771 = vadd.f32 %v759, %v767
        %v772 = vadd.f32 %v760, %v767
        %v773 = vadd.f32 %v761, %v767
        %v774 = vadd.f32 %v762, %v767
        %v775 = vadd.f32 %v763, %v767
        %v776 = vadd.f32 %v764, %v767
        %vm777 = vcmp.ge.f32.partialorder %v769, 0.0
        %vm778 = vcmp.ge.f32.partialorder %v770, 0.0
        %vm779 = vcmp.ge.f32.partialorder %v771, 0.0
        %vm780 = vcmp.ge.f32.partialorder %v772, 0.0
        %vm781 = vcmp.ge.f32.partialorder %v773, 0.0
        %vm782 = vcmp.ge.f32.partialorder %v774, 0.0
        %vm783 = vcmp.ge.f32.partialorder %v775, 0.0
        %vm784 = vcmp.ge.f32.partialorder %v776, 0.0
        %v785 = vmul.f32 %v769, 0.1
        %v786 = vmul.f32 %v770, 0.1
        %v787 = vmul.f32 %v771, 0.1
        %v788 = vmul.f32 %v772, 0.1
        %v789 = vmul.f32 %v773, 0.1
        %v790 = vmul.f32 %v774, 0.1
        %v791 = vmul.f32 %v775, 0.1
        %v792 = vmul.f32 %v776, 0.1
        %v793 = vsel %vm777, %v769, %v785
        %v794 = vsel %vm778, %v770, %v786
        %v795 = vsel %vm779, %v771, %v787
        %v796 = vsel %vm780, %v772, %v788
        %v797 = vsel %vm781, %v773, %v789
        %v798 = vsel %vm782, %v774, %v790
        %v799 = vsel %vm783, %v775, %v791
        %v800 = vsel %vm784, %v776, %v792
        %v801 = vpack.c.bf16 %v793, %v793
        %v802 = vpack.c.bf16 %v794, %v794
        %v803 = vpack.c.bf16 %v795, %v795
        %v804 = vpack.c.bf16 %v796, %v796
        %v805 = vpack.c.bf16 %v797, %v797
        %v806 = vpack.c.bf16 %v798, %v798
        %v807 = vpack.c.bf16 %v799, %v799
        %v808 = vpack.c.bf16 %v800, %v800
        %vm809 = vcmask 257024
        %810 = vst.msk [vmem:[%s477] sm:$0xf] %vm809, %v801
        %811 = vst.msk [vmem:[%s477 + $0x4] sm:$0xf] %vm809, %v802
        %812 = vst.msk [vmem:[%s477 + $0x8] sm:$0xf] %vm809, %v803
        %813 = vst.msk [vmem:[%s477 + $0xc] sm:$0xf] %vm809, %v804
        %814 = vst.msk [vmem:[%s477 + $0x10] sm:$0xf] %vm809, %v805
        %815 = vst.msk [vmem:[%s477 + $0x14] sm:$0xf] %vm809, %v806
        %816 = vst.msk [vmem:[%s477 + $0x18] sm:$0xf] %vm809, %v807
        %817 = vst.msk [vmem:[%s477 + $0x1c] sm:$0xf] %vm809, %v808
        %818 = vst.msk [vmem:[#allocation3 + $0x2] sm:$0xff] %vm546, %v793
        %819 = vst.msk [vmem:[#allocation3 + $0xa] sm:$0xff] %vm546, %v794
        %820 = vst.msk [vmem:[#allocation3 + $0x12] sm:$0xff] %vm546, %v795
        %821 = vst.msk [vmem:[#allocation3 + $0x1a] sm:$0xff] %vm546, %v796
        %822 = vst.msk [vmem:[#allocation3 + $0x22] sm:$0xff] %vm546, %v797
        %823 = vst.msk [vmem:[#allocation3 + $0x2a] sm:$0xff] %vm546, %v798
        %824 = vst.msk [vmem:[#allocation3 + $0x32] sm:$0xff] %vm546, %v799
        %825 = vst.msk [vmem:[#allocation3 + $0x3a] sm:$0xff] %vm546, %v800
        %v826 = vld [vmem:[#allocation3] ss:$2 sm:$0xff]
        %s827 = scalar_lea.vmem [#allocation3], 16
        %v828 = vld [vmem:[%s827] ss:$2 sm:$0xff]
        %s829 = scalar_lea.vmem [#allocation3], 32
        %v830 = vld [vmem:[%s829] ss:$2 sm:$0xff]
        %s831 = scalar_lea.vmem [#allocation3], 48
        %v832 = vld [vmem:[%s831] ss:$2 sm:$0xff]
        %s833 = scalar_lea.vmem [#allocation3], 1
        %v834 = vld [vmem:[%s833] ss:$2 sm:$0xff]
        %s835 = scalar_lea.vmem [#allocation3], 17
        %v836 = vld [vmem:[%s835] ss:$2 sm:$0xff]
        %s837 = scalar_lea.vmem [#allocation3], 33
        %v838 = vld [vmem:[%s837] ss:$2 sm:$0xff]
        %s839 = scalar_lea.vmem [#allocation3], 49
        %v840 = vld [vmem:[%s839] ss:$2 sm:$0xff]
        %s841 = scalar_lea.vmem [#allocation3], 2
        %v842 = vld [vmem:[%s841] ss:$2 sm:$0xff]
        %s843 = scalar_lea.vmem [#allocation3], 18
        %v844 = vld [vmem:[%s843] ss:$2 sm:$0xff]
        %s845 = scalar_lea.vmem [#allocation3], 34
        %v846 = vld [vmem:[%s845] ss:$2 sm:$0xff]
        %s847 = scalar_lea.vmem [#allocation3], 50
        %v848 = vld [vmem:[%s847] ss:$2 sm:$0xff]
        %s849 = scalar_lea.vmem [#allocation3], 3
        %v850 = vld [vmem:[%s849] ss:$2 sm:$0xff]
        %s851 = scalar_lea.vmem [#allocation3], 19
        %v852 = vld [vmem:[%s851] ss:$2 sm:$0xff]
        %s853 = scalar_lea.vmem [#allocation3], 35
        %v854 = vld [vmem:[%s853] ss:$2 sm:$0xff]
        %s855 = scalar_lea.vmem [#allocation3], 51
        %v856 = vld [vmem:[%s855] ss:$2 sm:$0xff]
        %s857 = scalar_lea.vmem [#allocation3], 4
        %v858 = vld [vmem:[%s857] ss:$2 sm:$0xff]
        %s859 = scalar_lea.vmem [#allocation3], 20
        %v860 = vld [vmem:[%s859] ss:$2 sm:$0xff]
        %s861 = scalar_lea.vmem [#allocation3], 36
        %v862 = vld [vmem:[%s861] ss:$2 sm:$0xff]
        %s863 = scalar_lea.vmem [#allocation3], 52
        %v864 = vld [vmem:[%s863] ss:$2 sm:$0xff]
        %869 = vrot.lane.b32.xlu0 %v834, 32
        %v870 = vpop.permute.xlu0 %869
        %871 = vrot.lane.b32.xlu0 %v836, 32
        %v872 = vpop.permute.xlu0 %871
        %873 = vrot.lane.b32.xlu0 %v838, 32
        %v874 = vpop.permute.xlu0 %873
        %875 = vrot.lane.b32.xlu0 %v840, 32
        %v876 = vpop.permute.xlu0 %875
        %885 = vrot.lane.b32.xlu0 %v842, 64
        %v886 = vpop.permute.xlu0 %885
        %887 = vrot.lane.b32.xlu0 %v844, 64
        %v888 = vpop.permute.xlu0 %887
        %889 = vrot.lane.b32.xlu0 %v846, 64
        %v890 = vpop.permute.xlu0 %889
        %891 = vrot.lane.b32.xlu0 %v848, 64
        %v892 = vpop.permute.xlu0 %891
        %901 = vrot.lane.b32.xlu0 %v850, 96
        %v902 = vpop.permute.xlu0 %901
        %903 = vrot.lane.b32.xlu0 %v852, 96
        %v904 = vpop.permute.xlu0 %903
        %905 = vrot.lane.b32.xlu0 %v854, 96
        %v906 = vpop.permute.xlu0 %905
        %907 = vrot.lane.b32.xlu0 %v856, 96
        %v908 = vpop.permute.xlu0 %907
        %v913 = vsel %vm546, %v826, %v870
        %v914 = vsel %vm546, %v828, %v872
        %v915 = vsel %vm546, %v830, %v874
        %v916 = vsel %vm546, %v832, %v876
        %vm917 = vcmask 523264
        %v918 = vsel %vm917, %v913, %v886
        %v919 = vsel %vm917, %v914, %v888
        %v920 = vsel %vm917, %v915, %v890
        %v921 = vsel %vm917, %v916, %v892
        %vm922 = vcmask 785408
        %v923 = vsel %vm922, %v918, %v902
        %v924 = vsel %vm922, %v919, %v904
        %v925 = vsel %vm922, %v920, %v906
        %v926 = vsel %vm922, %v921, %v908
        %v927 = vld [vmem:[%s3] sm:$0xff]
        %v928 = vld [vmem:[%s3 + $0x8] sm:$0xff]
        %v929 = vld [vmem:[%s3 + $0x10] sm:$0xff]
        %v930 = vld [vmem:[%s3 + $0x18] sm:$0xff]
        %v931 = vld [vmem:[%s3 + $0x20] sm:$0xff]
        %v932 = vld [vmem:[%s3 + $0x28] sm:$0xff]
        %v933 = vld [vmem:[%s3 + $0x30] sm:$0xff]
        %v934 = vld [vmem:[%s3 + $0x38] sm:$0xff]
        %v935 = vld [vmem:[%s3 + $0x40] sm:$0xff]
        %v936 = vld [vmem:[%s3 + $0x48] sm:$0xff]
        %v937 = vld [vmem:[%s3 + $0x50] sm:$0xff]
        %v938 = vld [vmem:[%s3 + $0x58] sm:$0xff]
        %v939 = vld [vmem:[%s3 + $0x60] sm:$0xff]
        %v940 = vld [vmem:[%s3 + $0x68] sm:$0xff]
        %v941 = vld [vmem:[%s3 + $0x70] sm:$0xff]
        %v942 = vld [vmem:[%s3 + $0x78] sm:$0xff]
        %v943 = vld [vmem:[%s3 + $0x80] sm:$0xff]
        %v944 = vld [vmem:[%s3 + $0x88] sm:$0xff]
        %v945 = vld [vmem:[%s3 + $0x90] sm:$0xff]
        %v946 = vld [vmem:[%s3 + $0x98] sm:$0xff]
        %v947 = vld [vmem:[%s4] sm:$0x1]
        %v949 = vperm.slane %v947, 0
        %v952 = vsel %vm546, %v858, 0
        %v955 = vsel %vm546, %v860, 0
        %v958 = vsel %vm546, %v862, 0
        %v961 = vsel %vm546, %v864, 0
        %963 = vmatpush.msra.mxu0 %v942
        %964 = vmatpush.msra.mxu0 %v941
        %965 = vmatpush.msra.mxu0 %v940
        %966 = vmatpush.msra.mxu0 %v939
        %967 = vmatpush.msra.mxu0 %v938
        %968 = vmatpush.msra.mxu0 %v937
        %969 = vmatpush.msra.mxu0 %v936
        %970 = vmatpush.msra.mxu0 %v935
        %971 = vmatpush.msra.mxu0 %v934
        %972 = vmatpush.msra.mxu0 %v933
        %973 = vmatpush.msra.mxu0 %v932
        %974 = vmatpush.msra.mxu0 %v931
        %975 = vmatpush.msra.mxu0 %v930
        %976 = vmatpush.msra.mxu0 %v929
        %977 = vmatpush.msra.mxu0 %v928
        %978 = vmatpush.msra.mxu0 %v927
        %979 = vmatmul.f32.gmra.mxu0 %v923
        %v980 = vpop.f32.mrf.mxu0
        %v981 = vadd.f32 %v949, %v980
        %982 = vmatmul.f32.gmra.mxu0 %v924
        %v983 = vpop.f32.mrf.mxu0
        %v984 = vadd.f32 %v949, %v983
        %985 = vmatmul.f32.gmra.mxu0 %v925
        %v986 = vpop.f32.mrf.mxu0
        %v987 = vadd.f32 %v949, %v986
        %988 = vmatmul.f32.gmra.mxu0 %v926
        %v989 = vpop.f32.mrf.mxu0
        %v990 = vadd.f32 %v949, %v989
        %991 = vdwg.mxu0
        %992 = vmatpush.msra.mxu0 0.0
        %993 = vmatpush.msra.mxu0 0.0
        %994 = vmatpush.msra.mxu0 0.0
        %995 = vmatpush.msra.mxu0 0.0
        %996 = vmatpush.msra.mxu0 0.0
        %997 = vmatpush.msra.mxu0 0.0
        %998 = vmatpush.msra.mxu0 0.0
        %999 = vmatpush.msra.mxu0 0.0
        %1000 = vmatpush.msra.mxu0 0.0
        %1001 = vmatpush.msra.mxu0 0.0
        %1002 = vmatpush.msra.mxu0 0.0
        %1003 = vmatpush.msra.mxu0 0.0
        %1004 = vmatpush.msra.mxu0 %v946
        %1005 = vmatpush.msra.mxu0 %v945
        %1006 = vmatpush.msra.mxu0 %v944
        %1007 = vmatpush.msra.mxu0 %v943
        %1008 = vmatmul.f32.gmra.mxu0 %v952
        %v1009 = vpop.f32.mrf.mxu0
        %v1010 = vadd.f32 %v981, %v1009
        %1011 = vmatmul.f32.gmra.mxu0 %v955
        %v1012 = vpop.f32.mrf.mxu0
        %v1013 = vadd.f32 %v984, %v1012
        %1014 = vmatmul.f32.gmra.mxu0 %v958
        %v1015 = vpop.f32.mrf.mxu0
        %v1016 = vadd.f32 %v987, %v1015
        %1017 = vmatmul.f32.gmra.mxu0 %v961
        %v1018 = vpop.f32.mrf.mxu0
        %v1019 = vadd.f32 %v990, %v1018
        %1020 = vdwg.mxu0
        %vm1021 = vcmp.ge.f32.partialorder %v1010, 0.0
        %vm1022 = vcmp.ge.f32.partialorder %v1013, 0.0
        %vm1023 = vcmp.ge.f32.partialorder %v1016, 0.0
        %vm1024 = vcmp.ge.f32.partialorder %v1019, 0.0
        %v1025 = vmul.f32 %v1010, 0.1
        %v1026 = vmul.f32 %v1013, 0.1
        %v1027 = vmul.f32 %v1016, 0.1
        %v1028 = vmul.f32 %v1019, 0.1
        %v1029 = vsel %vm1021, %v1010, %v1025
        %v1030 = vsel %vm1022, %v1013, %v1026
        %v1031 = vsel %vm1023, %v1016, %v1027
        %v1032 = vsel %vm1024, %v1019, %v1028
        %v1033 = vpack.c.bf16 %v1029, %v1029
        %v1034 = vpack.c.bf16 %v1030, %v1030
        %v1035 = vpack.c.bf16 %v1031, %v1031
        %v1036 = vpack.c.bf16 %v1032, %v1032
        %1037 = vst.msk [vmem:[%s446] sm:$0xf] %vm809, %v1033
        %1038 = vst.msk [vmem:[%s446 + $0x4] sm:$0xf] %vm809, %v1034
        %1039 = vst.msk [vmem:[%s446 + $0x8] sm:$0xf] %vm809, %v1035
        %1040 = vst.msk [vmem:[%s446 + $0xc] sm:$0xf] %vm809, %v1036
        %1041 = vst.msk [vmem:[#allocation4 + $0x2] sm:$0xff] %vm546, %v1029
        %1042 = vst.msk [vmem:[#allocation4 + $0xa] sm:$0xff] %vm546, %v1030
        %1043 = vst.msk [vmem:[#allocation4 + $0x12] sm:$0xff] %vm546, %v1031
        %1044 = vst.msk [vmem:[#allocation4 + $0x1a] sm:$0xff] %vm546, %v1032
        %v1045 = vld [vmem:[#allocation4] ss:$2 sm:$0xff]
        %s1046 = scalar_lea.vmem [#allocation4], 16
        %v1047 = vld [vmem:[%s1046] ss:$2 sm:$0xff]
        %s1048 = scalar_lea.vmem [#allocation4], 1
        %v1049 = vld [vmem:[%s1048] ss:$2 sm:$0xff]
        %s1050 = scalar_lea.vmem [#allocation4], 17
        %v1051 = vld [vmem:[%s1050] ss:$2 sm:$0xff]
        %s1052 = scalar_lea.vmem [#allocation4], 2
        %v1053 = vld [vmem:[%s1052] ss:$2 sm:$0xff]
        %s1054 = scalar_lea.vmem [#allocation4], 18
        %v1055 = vld [vmem:[%s1054] ss:$2 sm:$0xff]
        %s1056 = scalar_lea.vmem [#allocation4], 3
        %v1057 = vld [vmem:[%s1056] ss:$2 sm:$0xff]
        %s1058 = scalar_lea.vmem [#allocation4], 19
        %v1059 = vld [vmem:[%s1058] ss:$2 sm:$0xff]
        %s1060 = scalar_lea.vmem [#allocation4], 4
        %v1061 = vld [vmem:[%s1060] ss:$2 sm:$0xff]
        %s1062 = scalar_lea.vmem [#allocation4], 20
        %v1063 = vld [vmem:[%s1062] ss:$2 sm:$0xff]
        %1066 = vrot.lane.b32.xlu0 %v1049, 32
        %v1067 = vpop.permute.xlu0 %1066
        %1068 = vrot.lane.b32.xlu0 %v1051, 32
        %v1069 = vpop.permute.xlu0 %1068
        %1074 = vrot.lane.b32.xlu0 %v1053, 64
        %v1075 = vpop.permute.xlu0 %1074
        %1076 = vrot.lane.b32.xlu0 %v1055, 64
        %v1077 = vpop.permute.xlu0 %1076
        %1082 = vrot.lane.b32.xlu0 %v1057, 96
        %v1083 = vpop.permute.xlu0 %1082
        %1084 = vrot.lane.b32.xlu0 %v1059, 96
        %v1085 = vpop.permute.xlu0 %1084
        %v1088 = vsel %vm546, %v1045, %v1067
        %v1089 = vsel %vm546, %v1047, %v1069
        %v1090 = vsel %vm917, %v1088, %v1075
        %v1091 = vsel %vm917, %v1089, %v1077
        %v1092 = vsel %vm922, %v1090, %v1083
        %v1093 = vsel %vm922, %v1091, %v1085
        %v1094 = vld [vmem:[%s5] sm:$0xff]
        %v1095 = vld [vmem:[%s5 + $0x8] sm:$0xff]
        %v1096 = vld [vmem:[%s5 + $0x10] sm:$0xff]
        %v1097 = vld [vmem:[%s5 + $0x18] sm:$0xff]
        %v1098 = vld [vmem:[%s5 + $0x20] sm:$0xff]
        %v1099 = vld [vmem:[%s5 + $0x28] sm:$0xff]
        %v1100 = vld [vmem:[%s5 + $0x30] sm:$0xff]
        %v1101 = vld [vmem:[%s5 + $0x38] sm:$0xff]
        %v1102 = vld [vmem:[%s5 + $0x40] sm:$0xff]
        %v1103 = vld [vmem:[%s5 + $0x48] sm:$0xff]
        %v1104 = vld [vmem:[%s5 + $0x50] sm:$0xff]
        %v1105 = vld [vmem:[%s5 + $0x58] sm:$0xff]
        %v1106 = vld [vmem:[%s5 + $0x60] sm:$0xff]
        %v1107 = vld [vmem:[%s5 + $0x68] sm:$0xff]
        %v1108 = vld [vmem:[%s5 + $0x70] sm:$0xff]
        %v1109 = vld [vmem:[%s5 + $0x78] sm:$0xff]
        %v1110 = vld [vmem:[%s5 + $0x80] sm:$0xff]
        %v1111 = vld [vmem:[%s5 + $0x88] sm:$0xff]
        %v1112 = vld [vmem:[%s5 + $0x90] sm:$0xff]
        %v1113 = vld [vmem:[%s5 + $0x98] sm:$0xff]
        %v1114 = vld [vmem:[%s6] sm:$0x1]
        %v1116 = vperm.slane %v1114, 0
        %v1119 = vsel %vm546, %v1061, 0
        %v1122 = vsel %vm546, %v1063, 0
        %1124 = vmatpush.msra.mxu0 %v1109
        %1125 = vmatpush.msra.mxu0 %v1108
        %1126 = vmatpush.msra.mxu0 %v1107
        %1127 = vmatpush.msra.mxu0 %v1106
        %1128 = vmatpush.msra.mxu0 %v1105
        %1129 = vmatpush.msra.mxu0 %v1104
        %1130 = vmatpush.msra.mxu0 %v1103
        %1131 = vmatpush.msra.mxu0 %v1102
        %1132 = vmatpush.msra.mxu0 %v1101
        %1133 = vmatpush.msra.mxu0 %v1100
        %1134 = vmatpush.msra.mxu0 %v1099
        %1135 = vmatpush.msra.mxu0 %v1098
        %1136 = vmatpush.msra.mxu0 %v1097
        %1137 = vmatpush.msra.mxu0 %v1096
        %1138 = vmatpush.msra.mxu0 %v1095
        %1139 = vmatpush.msra.mxu0 %v1094
        %1140 = vmatmul.f32.gmra.mxu0 %v1092
        %v1141 = vpop.f32.mrf.mxu0
        %v1142 = vadd.f32 %v1116, %v1141
        %1143 = vmatmul.f32.gmra.mxu0 %v1093
        %v1144 = vpop.f32.mrf.mxu0
        %v1145 = vadd.f32 %v1116, %v1144
        %1146 = vdwg.mxu0
        %1147 = vmatpush.msra.mxu0 0.0
        %1148 = vmatpush.msra.mxu0 0.0
        %1149 = vmatpush.msra.mxu0 0.0
        %1150 = vmatpush.msra.mxu0 0.0
        %1151 = vmatpush.msra.mxu0 0.0
        %1152 = vmatpush.msra.mxu0 0.0
        %1153 = vmatpush.msra.mxu0 0.0
        %1154 = vmatpush.msra.mxu0 0.0
        %1155 = vmatpush.msra.mxu0 0.0
        %1156 = vmatpush.msra.mxu0 0.0
        %1157 = vmatpush.msra.mxu0 0.0
        %1158 = vmatpush.msra.mxu0 0.0
        %1159 = vmatpush.msra.mxu0 %v1113
        %1160 = vmatpush.msra.mxu0 %v1112
        %1161 = vmatpush.msra.mxu0 %v1111
        %1162 = vmatpush.msra.mxu0 %v1110
        %1163 = vmatmul.f32.gmra.mxu0 %v1119
        %v1164 = vpop.f32.mrf.mxu0
        %v1165 = vadd.f32 %v1142, %v1164
        %1166 = vmatmul.f32.gmra.mxu0 %v1122
        %v1167 = vpop.f32.mrf.mxu0
        %v1168 = vadd.f32 %v1145, %v1167
        %1169 = vdwg.mxu0
        %vm1170 = vcmp.ge.f32.partialorder %v1165, 0.0
        %vm1171 = vcmp.ge.f32.partialorder %v1168, 0.0
        %v1172 = vmul.f32 %v1165, 0.1
        %v1173 = vmul.f32 %v1168, 0.1
        %v1174 = vsel %vm1170, %v1165, %v1172
        %v1175 = vsel %vm1171, %v1168, %v1173
        %v1176 = vpack.c.bf16 %v1174, %v1174
        %v1177 = vpack.c.bf16 %v1175, %v1175
        %vm1178 = vcmask 519168
        %1179 = vst.msk [vmem:[%s453] sm:$0xf] %vm1178, %v1176
        %1180 = vst.msk [vmem:[%s453 + $0x4] sm:$0xf] %vm1178, %v1177
        %1181 = vst.msk [vmem:[#allocation5 + $0x1] sm:$0xff] %vm917, %v1174
        %1182 = vst.msk [vmem:[#allocation5 + $0x9] sm:$0xff] %vm917, %v1175
        %v1183 = vld [vmem:[#allocation5] sm:$0xff]
        %v1184 = vld [vmem:[#allocation5 + $0x8] sm:$0xff]
        %v1185 = vld [vmem:[%s7] sm:$0x1]
        %v1187 = vperm.slane %v1185, 0
        %v1189 = vmul.f32 %v1183, %v1187
        %v1190 = vmul.f32 %v1184, %v1187
        %v1191 = vld [vmem:[#allocation5 + $0x1] sm:$0xff]
        %v1192 = vld [vmem:[#allocation5 + $0x9] sm:$0xff]
        %s1193 = scalar_lea.vmem %s7, 1
        %v1194 = vld [vmem:[%s1193] sm:$0x1]
        %v1196 = vperm.slane %v1194, 0
        %v1198 = vmul.f32 %v1191, %v1196
        %v1199 = vmul.f32 %v1192, %v1196
        %v1200 = vadd.f32 %v1189, %v1198
        %v1201 = vadd.f32 %v1190, %v1199
        %v1202 = vld [vmem:[#allocation5 + $0x2] sm:$0xff]
        %v1203 = vld [vmem:[#allocation5 + $0xa] sm:$0xff]
        %s1204 = scalar_lea.vmem %s7, 2
        %v1205 = vld [vmem:[%s1204] sm:$0x1]
        %v1207 = vperm.slane %v1205, 0
        %v1209 = vmul.f32 %v1202, %v1207
        %v1210 = vmul.f32 %v1203, %v1207
        %v1211 = vadd.f32 %v1200, %v1209
        %v1212 = vadd.f32 %v1201, %v1210
        %v1213 = vsel %vm917, %v1211, 0.0
        %1214 = vadd.xlane.f32.xlu0 %v1213
        %v1215 = vpop.xlane.xlu0 %1214
        %v1216 = vsel %vm917, %v1212, 0.0
        %1217 = vadd.xlane.f32.xlu0 %v1216
        %v1218 = vpop.xlane.xlu0 %1217
        %v1219 = vld [vmem:[#allocation6] sm:$0x1]
        %v1221 = vperm.slane %v1219, 0
        %v1223 = vadd.f32 %v1215, %v1221
        %v1224 = vadd.f32 %v1218, %v1221
        %1225 = vst.msk [vmem:[%s482] sm:$0xff] %vm614, %v1223
        %1226 = vst.msk [vmem:[%s482 + $0x8] sm:$0xff] %vm614, %v1224
        %p1227 = scmp.lt.s32.totalorder %s33, 3
        %s1228 = scalar_select %p1227, %s33, 3
        %s1229 = smul.addr %s1228, 8
        %s1230 = smul.addr %s1229, 4
        %s1231 = scalar_lea.vmem %s9, %s1230
        %s1232 = sand.u32 %s261, 1
        %s1233 = scalar_lea.sflag [#allocation8], %s1232
        %s1234 = sand.u32 %s261, 1
        %s1235 = smul.addr %s1234, 16
        %s1236 = scalar_lea.vmem [#allocation7], %s1235
        %s1237 = sand.u32 %s287, 1
        %s1238 = scalar_lea.sflag [#allocation10], %s1237
        %s1239 = sand.u32 %s287, 1
        %s1240 = smul.addr %s1239, 8
        %s1241 = scalar_lea.vmem [#allocation9], %s1240
        %p1242 = scmp.lt.s32.totalorder %s33, 3
        %s1243 = scalar_select %p1242, %s33, 3
        %s1244 = smul.addr %s1243, 2
        %s1245 = smul.addr %s1244, 8
        %s1246 = scalar_lea.vmem %s12, %s1245
        %p1247 = scmp.lt.s32.totalorder %s33, 3
        %s1248 = scalar_select %p1247, %s33, 3
        %s1249 = smul.addr %s1248, 5
        %s1250 = smul.addr %s1249, 8
        %s1251 = scalar_lea.vmem %s13, %s1250
        // Predicated region
        $region57: #{tpu_custom_call.1} parent=55 // pred_check
          %p1252 = pneg %p245
        $region58: #{tpu_custom_call.1} parent=55 // pred_check_branch
          %1254 = sbr.rel (%p1252) target = $region60
        $region59: #{tpu_custom_call.1} parent=55 // pred_region
          _
        $region60: #{tpu_custom_call.1} parent=55 // pred_fallthru
          _
        // Predicated region
        $region61: #{tpu_custom_call.1} parent=55 // pred_check
          %p1255 = pneg %p271
        $region62: #{tpu_custom_call.1} parent=55 // pred_check_branch
          %1257 = sbr.rel (%p1255) target = $region64
        $region63: #{tpu_custom_call.1} parent=55 // pred_region
          %1259 = vsyncadd %s1233, 0
          %s1260 = smul.addr %s33, 4
          %s1261 = smul.addr %s1260, 4
          %s1262 = scalar_lea.hbm %s10, %s1261
          %s1263 = sshll.u32 %s1236, 4
          %s1264 = int_to_ptr.vmem [resolvable:$true] %s1263
          %s1265 = sshll.u32 %s1262, 4
          %s1266 = int_to_ptr.hbm [resolvable:$true] %s1265
          %1271 = dma.vmem_to_hbm [thread:$0]  %s1264, 256, %s1266, %s1233, 64, 64, 4
        $region64: #{tpu_custom_call.1} parent=55 // pred_fallthru
          _
        // Predicated region
        $region65: #{tpu_custom_call.1} parent=55 // pred_check
          %p1272 = pneg %p297
        $region66: #{tpu_custom_call.1} parent=55 // pred_check_branch
          %1274 = sbr.rel (%p1272) target = $region68
        $region67: #{tpu_custom_call.1} parent=55 // pred_region
          %1276 = vsyncadd %s1238, 0
          %s1277 = smul.addr %s33, 2
          %s1278 = smul.addr %s1277, 4
          %s1279 = scalar_lea.hbm %s11, %s1278
          %s1280 = sshll.u32 %s1241, 4
          %s1281 = int_to_ptr.vmem [resolvable:$true] %s1280
          %s1282 = sshll.u32 %s1279, 4
          %s1283 = int_to_ptr.hbm [resolvable:$true] %s1282
          %1288 = dma.vmem_to_hbm [thread:$0]  %s1281, 128, %s1283, %s1238, 64, 64, 4
        $region68: #{tpu_custom_call.1} parent=55 // pred_fallthru
          _
        // Predicated region
        $region69: #{tpu_custom_call.1} parent=55 // pred_check
          %p1289 = pneg %p323
        $region70: #{tpu_custom_call.1} parent=55 // pred_check_branch
          %1291 = sbr.rel (%p1289) target = $region72
        $region71: #{tpu_custom_call.1} parent=55 // pred_region
          _
        $region72: #{tpu_custom_call.1} parent=55 // pred_fallthru
          _
        // Predicated region
        $region73: #{tpu_custom_call.1} parent=55 // pred_check
          %p1292 = pneg %p349
        $region74: #{tpu_custom_call.1} parent=55 // pred_check_branch
          %1294 = sbr.rel (%p1292) target = $region76
        $region75: #{tpu_custom_call.1} parent=55 // pred_region
          _
        $region76: #{tpu_custom_call.1} parent=55 // pred_fallthru
          _
      $region56: #{tpu_custom_call.1} parent=5 // pred_fallthru
        _
      %p1295 = scmp.le.s32.totalorder 2, %s28
      // Predicated region
      $region77: #{tpu_custom_call.1} parent=5 // pred_check
        %p1296 = pneg %p1295
      $region78: #{tpu_custom_call.1} parent=5 // pred_check_branch
        %1298 = sbr.rel (%p1296) target = $region80
      $region79: #{tpu_custom_call.1} parent=5 // pred_region
        %s1299 = ssub.s32 %s28, 2
        // Predicated region
        $region81: #{tpu_custom_call.1} parent=79 // pred_check
          %p1300 = pneg %p251
        $region82: #{tpu_custom_call.1} parent=79 // pred_check_branch
          %1302 = sbr.rel (%p1300) target = $region84
        $region83: #{tpu_custom_call.1} parent=79 // pred_region
          %p1303 = scmp.lt.s32.totalorder %s34, 3
          %s1304 = scalar_select %p1303, %s34, 3
          %s1305 = smul.addr %s1304, 8
          %s1306 = smul.addr %s1305, 4
          %s1307 = scalar_lea.vmem %s9, %s1306
        $region84: #{tpu_custom_call.1} parent=79 // pred_fallthru
          _
        // Predicated region
        $region85: #{tpu_custom_call.1} parent=79 // pred_check
          %p1308 = pneg %p277
        $region86: #{tpu_custom_call.1} parent=79 // pred_check_branch
          %1310 = sbr.rel (%p1308) target = $region88
        $region87: #{tpu_custom_call.1} parent=79 // pred_region
          %s1311 = sand.u32 %s262, 1
          %s1312 = scalar_lea.sflag [#allocation8], %s1311
          %s1313 = sand.u32 %s262, 1
          %s1314 = smul.addr %s1313, 16
          %s1315 = scalar_lea.vmem [#allocation7], %s1314
          %1317 = dma.done %s1312, 256
        $region88: #{tpu_custom_call.1} parent=79 // pred_fallthru
          _
        // Predicated region
        $region89: #{tpu_custom_call.1} parent=79 // pred_check
          %p1318 = pneg %p303
        $region90: #{tpu_custom_call.1} parent=79 // pred_check_branch
          %1320 = sbr.rel (%p1318) target = $region92
        $region91: #{tpu_custom_call.1} parent=79 // pred_region
          %s1321 = sand.u32 %s288, 1
          %s1322 = scalar_lea.sflag [#allocation10], %s1321
          %s1323 = sand.u32 %s288, 1
          %s1324 = smul.addr %s1323, 8
          %s1325 = scalar_lea.vmem [#allocation9], %s1324
          %1327 = dma.done %s1322, 128
        $region92: #{tpu_custom_call.1} parent=79 // pred_fallthru
          _
        // Predicated region
        $region93: #{tpu_custom_call.1} parent=79 // pred_check
          %p1328 = pneg %p329
        $region94: #{tpu_custom_call.1} parent=79 // pred_check_branch
          %1330 = sbr.rel (%p1328) target = $region96
        $region95: #{tpu_custom_call.1} parent=79 // pred_region
          %p1331 = scmp.lt.s32.totalorder %s34, 3
          %s1332 = scalar_select %p1331, %s34, 3
          %s1333 = smul.addr %s1332, 2
          %s1334 = smul.addr %s1333, 8
          %s1335 = scalar_lea.vmem %s12, %s1334
        $region96: #{tpu_custom_call.1} parent=79 // pred_fallthru
          _
        // Predicated region
        $region97: #{tpu_custom_call.1} parent=79 // pred_check
          %p1336 = pneg %p355
        $region98: #{tpu_custom_call.1} parent=79 // pred_check_branch
          %1338 = sbr.rel (%p1336) target = $region100
        $region99: #{tpu_custom_call.1} parent=79 // pred_region
          %p1339 = scmp.lt.s32.totalorder %s34, 3
          %s1340 = scalar_select %p1339, %s34, 3
          %s1341 = smul.addr %s1340, 5
          %s1342 = smul.addr %s1341, 8
          %s1343 = scalar_lea.vmem %s13, %s1342
        $region100: #{tpu_custom_call.1} parent=79 // pred_fallthru
          _
      $region80: #{tpu_custom_call.1} parent=5 // pred_fallthru
        _
    $region6: #{tpu_custom_call.1} parent=1 // loop_footer
      %s32 = sadd.s32 1, %s28
    $region7: #{tpu_custom_call.1} parent=1 // loop_footer_branch
      %27 = sbr.rel target = $region3
    $region8: #{tpu_custom_call.1} parent=1 // loop_exit
      _
    %1344 = vsyncpa [#allocation8], 1
    %s1345 = scalar_lea.sflag [#allocation8], 1
    %1346 = vsyncpa %s1345, 1
    %1347 = vsyncpa [#allocation10], 1
    %s1348 = scalar_lea.sflag [#allocation10], 1
    %1349 = vsyncpa %s1348, 1

</llo_original>
